<compile_context>
chip_gen: v7x
topology: tpu7x:2x2x1
jax: 0.10.0
libtpu: 0.0.40
codegen_flags: <defaults>
</compile_context>

<pallas_src>
import functools

import jax
import jax.numpy as jnp
from jax import lax
from jax.experimental import pallas as pl
from jax.experimental.pallas import tpu as pltpu

EPS = 1e-5
GUARD = 128  # zero guard columns each side of the frame (>= max tap offset, tile-aligned)


def _residual_block_kernel(xg_ref, mask_ref, w1_ref, g1_ref, be1_ref,
                           w2_ref, g2_ref, be2_ref,
                           o_ref, slab_ref, hg_ref, *, offsets, inv_m):
    """Whole residual block on a lane-dense flattened frame.

    xg_ref  : (C, GUARD+F+GUARD) guarded, zero-padded flat input frame (channels x lanes)
    mask_ref: (1, F)  1.0 at valid (interior) output positions, 0.0 at halo/tail columns
    w*_ref  : (C, 9*C) im2col weight matrices, column index = (ky*3+kx)*C + ci
    g*/be*  : (C, 1)   BatchNorm gamma / beta
    o_ref   : (C, F)   output frame (interior extracted by the wrapper)
    slab_ref: (9*C, F) VMEM scratch: im2col slab (reused by both convs)
    hg_ref  : (C, GUARD+F+GUARD) VMEM scratch: guarded intermediate activation
    """
    C, F = o_ref.shape
    mask = mask_ref[...]                                        # (1, F)

    def conv(src_ref, w_ref):
        # Build the im2col slab: 9 shifted windows of the frame stacked on sublanes
        # (static, sublane-aligned stores), then a single fused GEMM on the MXU.
        for t, d in enumerate(offsets):
            slab_ref[t * C:(t + 1) * C, :] = src_ref[:, GUARD + d:GUARD + d + F]
        return jnp.dot(w_ref[...], slab_ref[...],
                       preferred_element_type=jnp.float32)      # (C, F)

    def batchnorm(y, g_ref, be_ref):
        # Training-mode BN over interior positions only, single pass over the data.
        ym = y * mask
        s1 = jnp.sum(ym, axis=1, keepdims=True)                 # (C, 1)
        s2 = jnp.sum(ym * ym, axis=1, keepdims=True)            # (C, 1)
        mean = s1 * inv_m
        var = s2 * inv_m - mean * mean                          # biased variance
        scale = g_ref[...] * lax.rsqrt(var + EPS)               # EUP rsqrt
        return (y - mean) * scale + be_ref[...]

    # conv1 -> bn1 -> relu ; re-mask so halo/tail columns are exact zeros
    # (this IS conv2's implicit zero padding -- no padded-scratch rewrite needed).
    h = jnp.maximum(batchnorm(conv(xg_ref, w1_ref), g1_ref, be1_ref), 0.0) * mask

    # Stage the intermediate into the guarded scratch: zero the two guard tiles,
    # one aligned lane-dense store for the frame body.
    hg_ref[:, 0:GUARD] = jnp.zeros((C, GUARD), jnp.float32)
    hg_ref[:, GUARD + F:GUARD + F + GUARD] = jnp.zeros((C, GUARD), jnp.float32)
    hg_ref[:, GUARD:GUARD + F] = h

    # conv2 -> bn2 -> residual add -> relu (halo columns hold garbage; discarded later).
    y2 = batchnorm(conv(hg_ref, w2_ref), g2_ref, be2_ref)
    o_ref[...] = jnp.maximum(y2 + xg_ref[:, GUARD:GUARD + F], 0.0)


def init_params(key, c):
    """Deterministic init mimicking PyTorch defaults (uniform conv, BN gamma=1, beta=0)."""
    k1, k2, k3, k4 = jax.random.split(key, 4)
    fan_in = c * 3 * 3
    bound = 1.0 / (fan_in ** 0.5)
    return dict(
        W1=jax.random.uniform(k1, (c, c, 3, 3), jnp.float32, -bound, bound),
        b1=jax.random.uniform(k2, (c,), jnp.float32, -bound, bound),
        W2=jax.random.uniform(k3, (c, c, 3, 3), jnp.float32, -bound, bound),
        b2=jax.random.uniform(k4, (c,), jnp.float32, -bound, bound),
        g1=jnp.ones((c,), jnp.float32), be1=jnp.zeros((c,), jnp.float32),
        g2=jnp.ones((c,), jnp.float32), be2=jnp.zeros((c,), jnp.float32),
    )


@jax.jit
def residual_block_forward(x_nchw, params):
    x = x_nchw.astype(jnp.float32)
    N, C, H, W = x.shape
    Hp, Wp = H + 2, W + 2
    L = Hp * Wp
    NL = N * L
    F = pl.cdiv(NL, 128) * 128             # lane-aligned frame width
    M = N * H * W                           # number of valid output positions (BN count)

    # NCHW -> (C, N*Hp*Wp) flat zero-padded frame, plus lane guards on each side.
    xp = jnp.pad(x, ((0, 0), (0, 0), (1, 1), (1, 1)))
    xflat = jnp.transpose(xp, (1, 0, 2, 3)).reshape(C, NL)
    xg = jnp.pad(xflat, ((0, 0), (GUARD, GUARD + (F - NL))))    # (C, GUARD+F+GUARD)

    # Interior mask over the frame (1.0 = real output position, 0.0 = halo/tail).
    idx = jnp.arange(F)
    q = idx % L
    hp, wp = q // Wp, q % Wp
    interior = (idx < NL) & (hp >= 1) & (hp <= H) & (wp >= 1) & (wp <= W)
    mask = interior.astype(jnp.float32).reshape(1, F)

    # Conv weights as im2col matrices (Cout, 9*Cin). Conv biases are intentionally NOT
    # passed: a per-channel constant added before training-mode BN cancels in the mean.
    def im2col_w(Wt):  # (Cout, Cin, 3, 3) -> (Cout, 3, 3, Cin) -> (Cout, 9*Cin)
        return jnp.transpose(Wt, (0, 2, 3, 1)).reshape(C, 9 * C)

    # Flat tap offsets within the padded frame, tap order t = ky*3 + kx.
    offsets = tuple((ky - 1) * Wp + (kx - 1) for ky in range(3) for kx in range(3))

    kernel = functools.partial(_residual_block_kernel, offsets=offsets, inv_m=1.0 / M)
    args = (xg, mask,
            im2col_w(params['W1']), params['g1'].reshape(C, 1), params['be1'].reshape(C, 1),
            im2col_w(params['W2']), params['g2'].reshape(C, 1), params['be2'].reshape(C, 1))

    out_frame = pl.pallas_call(
        kernel,
        out_shape=jax.ShapeDtypeStruct((C, F), jnp.float32),
        in_specs=[pl.BlockSpec(memory_space=pltpu.MemorySpace.VMEM)] * len(args),
        out_specs=pl.BlockSpec(memory_space=pltpu.MemorySpace.VMEM),
        scratch_shapes=[pltpu.VMEM((9 * C, F), jnp.float32),
                        pltpu.VMEM((C, F + 2 * GUARD), jnp.float32)],
    )(*args)

    # Extract interior positions and return NCHW (tiny XLA ops on ~4K elements).
    out = out_frame[:, :NL].reshape(C, N, Hp, Wp)[:, :, 1:-1, 1:-1]
    return jnp.transpose(out, (1, 0, 2, 3))


def reference_forward(x, params):
    """Pure-JAX reference (NCHW) mirroring the PyTorch module in training mode."""
    def conv(x, Wt, b):
        y = lax.conv_general_dilated(x, Wt, (1, 1), 'SAME',
                                     dimension_numbers=('NCHW', 'OIHW', 'NCHW'))
        return y + b[None, :, None, None]

    def bn(x, g, be):
        mean = jnp.mean(x, axis=(0, 2, 3), keepdims=True)
        var = jnp.mean((x - mean) ** 2, axis=(0, 2, 3), keepdims=True)
        return (g[None, :, None, None] * (x - mean) * lax.rsqrt(var + EPS)
                + be[None, :, None, None])

    y = jax.nn.relu(bn(conv(x, params['W1'], params['b1']), params['g1'], params['be1']))
    y = bn(conv(y, params['W2'], params['b2']), params['g2'], params['be2'])
    return jax.nn.relu(y + x)


if __name__ == "__main__":
    key = jax.random.PRNGKey(0)
    kx_, kp_ = jax.random.split(key)

    N, C, H, W = 2, 8, 16, 16          # num_filters = 8
    x = jax.random.normal(kx_, (N, C, H, W), jnp.float32)
    params = init_params(kp_, C)

    out = jax.block_until_ready(residual_block_forward(x, params))

    ref = reference_forward(x, params)
    if not jnp.allclose(out, ref, atol=2e-3, rtol=2e-3):
        max_err = float(jnp.max(jnp.abs(out - ref)))
        raise AssertionError(f"Pallas output mismatch vs reference, max abs err={max_err}")

    print("KERNEL_OK")
</pallas_src>

<mosaic_0001>
module attributes {stable_mosaic.version = 11 : i64} {
  func.func @_residual_block_kernel(%arg0: memref<8x1024xf32, #tpu.memory_space<vmem>>, %arg1: memref<1x768xf32, #tpu.memory_space<vmem>>, %arg2: memref<8x72xf32, #tpu.memory_space<vmem>>, %arg3: memref<8x1xf32, #tpu.memory_space<vmem>>, %arg4: memref<8x1xf32, #tpu.memory_space<vmem>>, %arg5: memref<8x72xf32, #tpu.memory_space<vmem>>, %arg6: memref<8x1xf32, #tpu.memory_space<vmem>>, %arg7: memref<8x1xf32, #tpu.memory_space<vmem>>, %arg8: memref<8x768xf32, #tpu.memory_space<vmem>>, %arg9: memref<72x768xf32, #tpu.memory_space<vmem>>, %arg10: memref<8x1024xf32, #tpu.memory_space<vmem>>) attributes {dimension_semantics = [], scalar_prefetch = 0 : i64, scratch_operands = 2 : i64, tpu.core_type = #tpu.core_type<tc>} {
    %c0 = arith.constant 0 : index
    %c0_0 = arith.constant 0 : index
    %0 = vector.load %arg1[%c0, %c0_0] : memref<1x768xf32, #tpu.memory_space<vmem>>, vector<1x768xf32>
    %c0_1 = arith.constant 0 : index
    %c109 = arith.constant 109 : index
    %1 = vector.load %arg0[%c0_1, %c109] : memref<8x1024xf32, #tpu.memory_space<vmem>>, vector<8x768xf32>
    %c0_2 = arith.constant 0 : index
    %c0_3 = arith.constant 0 : index
    %2 = vector.load %arg9[%c0_2, %c0_3] : memref<72x768xf32, #tpu.memory_space<vmem>>, vector<8x768xf32>
    tpu.vector_store %arg9[%c0_2, %c0_3], %1 {strides = array<i32>} : memref<72x768xf32, #tpu.memory_space<vmem>>, vector<8x768xf32>,
    %c0_4 = arith.constant 0 : index
    %c110 = arith.constant 110 : index
    %3 = vector.load %arg0[%c0_4, %c110] : memref<8x1024xf32, #tpu.memory_space<vmem>>, vector<8x768xf32>
    %c8 = arith.constant 8 : index
    %c0_5 = arith.constant 0 : index
    %4 = vector.load %arg9[%c8, %c0_5] : memref<72x768xf32, #tpu.memory_space<vmem>>, vector<8x768xf32>
    tpu.vector_store %arg9[%c8, %c0_5], %3 {strides = array<i32>} : memref<72x768xf32, #tpu.memory_space<vmem>>, vector<8x768xf32>,
    %c0_6 = arith.constant 0 : index
    %c111 = arith.constant 111 : index
    %5 = vector.load %arg0[%c0_6, %c111] : memref<8x1024xf32, #tpu.memory_space<vmem>>, vector<8x768xf32>
    %c16 = arith.constant 16 : index
    %c0_7 = arith.constant 0 : index
    %6 = vector.load %arg9[%c16, %c0_7] : memref<72x768xf32, #tpu.memory_space<vmem>>, vector<8x768xf32>
    tpu.vector_store %arg9[%c16, %c0_7], %5 {strides = array<i32>} : memref<72x768xf32, #tpu.memory_space<vmem>>, vector<8x768xf32>,
    %c0_8 = arith.constant 0 : index
    %c127 = arith.constant 127 : index
    %7 = vector.load %arg0[%c0_8, %c127] : memref<8x1024xf32, #tpu.memory_space<vmem>>, vector<8x768xf32>
    %c24 = arith.constant 24 : index
    %c0_9 = arith.constant 0 : index
    %8 = vector.load %arg9[%c24, %c0_9] : memref<72x768xf32, #tpu.memory_space<vmem>>, vector<8x768xf32>
    tpu.vector_store %arg9[%c24, %c0_9], %7 {strides = array<i32>} : memref<72x768xf32, #tpu.memory_space<vmem>>, vector<8x768xf32>,
    %c0_10 = arith.constant 0 : index
    %c128 = arith.constant 128 : index
    %9 = vector.load %arg0[%c0_10, %c128] : memref<8x1024xf32, #tpu.memory_space<vmem>>, vector<8x768xf32>
    %c32 = arith.constant 32 : index
    %c0_11 = arith.constant 0 : index
    %10 = vector.load %arg9[%c32, %c0_11] : memref<72x768xf32, #tpu.memory_space<vmem>>, vector<8x768xf32>
    tpu.vector_store %arg9[%c32, %c0_11], %9 {strides = array<i32>} : memref<72x768xf32, #tpu.memory_space<vmem>>, vector<8x768xf32>,
    %c0_12 = arith.constant 0 : index
    %c129 = arith.constant 129 : index
    %11 = vector.load %arg0[%c0_12, %c129] : memref<8x1024xf32, #tpu.memory_space<vmem>>, vector<8x768xf32>
    %c40 = arith.constant 40 : index
    %c0_13 = arith.constant 0 : index
    %12 = vector.load %arg9[%c40, %c0_13] : memref<72x768xf32, #tpu.memory_space<vmem>>, vector<8x768xf32>
    tpu.vector_store %arg9[%c40, %c0_13], %11 {strides = array<i32>} : memref<72x768xf32, #tpu.memory_space<vmem>>, vector<8x768xf32>,
    %c0_14 = arith.constant 0 : index
    %c145 = arith.constant 145 : index
    %13 = vector.load %arg0[%c0_14, %c145] : memref<8x1024xf32, #tpu.memory_space<vmem>>, vector<8x768xf32>
    %c48 = arith.constant 48 : index
    %c0_15 = arith.constant 0 : index
    %14 = vector.load %arg9[%c48, %c0_15] : memref<72x768xf32, #tpu.memory_space<vmem>>, vector<8x768xf32>
    tpu.vector_store %arg9[%c48, %c0_15], %13 {strides = array<i32>} : memref<72x768xf32, #tpu.memory_space<vmem>>, vector<8x768xf32>,
    %c0_16 = arith.constant 0 : index
    %c146 = arith.constant 146 : index
    %15 = vector.load %arg0[%c0_16, %c146] : memref<8x1024xf32, #tpu.memory_space<vmem>>, vector<8x768xf32>
    %c56 = arith.constant 56 : index
    %c0_17 = arith.constant 0 : index
    %16 = vector.load %arg9[%c56, %c0_17] : memref<72x768xf32, #tpu.memory_space<vmem>>, vector<8x768xf32>
    tpu.vector_store %arg9[%c56, %c0_17], %15 {strides = array<i32>} : memref<72x768xf32, #tpu.memory_space<vmem>>, vector<8x768xf32>,
    %c0_18 = arith.constant 0 : index
    %c147 = arith.constant 147 : index
    %17 = vector.load %arg0[%c0_18, %c147] : memref<8x1024xf32, #tpu.memory_space<vmem>>, vector<8x768xf32>
    %c64 = arith.constant 64 : index
    %c0_19 = arith.constant 0 : index
    %18 = vector.load %arg9[%c64, %c0_19] : memref<72x768xf32, #tpu.memory_space<vmem>>, vector<8x768xf32>
    tpu.vector_store %arg9[%c64, %c0_19], %17 {strides = array<i32>} : memref<72x768xf32, #tpu.memory_space<vmem>>, vector<8x768xf32>,
    %c0_20 = arith.constant 0 : index
    %c0_21 = arith.constant 0 : index
    %19 = vector.load %arg2[%c0_20, %c0_21] : memref<8x72xf32, #tpu.memory_space<vmem>>, vector<8x72xf32>
    %c0_22 = arith.constant 0 : index
    %c0_23 = arith.constant 0 : index
    %20 = vector.load %arg9[%c0_22, %c0_23] : memref<72x768xf32, #tpu.memory_space<vmem>>, vector<72x768xf32>
    %cst = arith.constant dense<0.000000e+00> : vector<8x768xf32>
    %21 = tpu.matmul %19, %20, %cst {dimension_numbers = #tpu.dot_dimension_numbers<[1], [0], [0], [1], [0, 0, 1, 1], [], []>} : vector<8x72xf32>, vector<72x768xf32>, vector<8x768xf32> -> vector<8x768xf32>
    %22 = vector.broadcast %0 : vector<1x768xf32> to vector<8x768xf32>
    %23 = arith.mulf %21, %22 : vector<8x768xf32>
    %cst_24 = arith.constant dense<0.000000e+00> : vector<8xf32>
    %24 = vector.multi_reduction <add>, %23, %cst_24 [1] : vector<8x768xf32> to vector<8xf32>
    %25 = vector.shape_cast %24 : vector<8xf32> to vector<8x1xf32>
    %26 = arith.mulf %23, %23 : vector<8x768xf32>
    %cst_25 = arith.constant dense<0.000000e+00> : vector<8xf32>
    %27 = vector.multi_reduction <add>, %26, %cst_25 [1] : vector<8x768xf32> to vector<8xf32>
    %28 = vector.shape_cast %27 : vector<8xf32> to vector<8x1xf32>
    %cst_26 = arith.constant 0.001953125 : f32
    %29 = vector.broadcast %cst_26 : f32 to vector<8x1xf32>
    %30 = arith.mulf %25, %29 : vector<8x1xf32>
    %cst_27 = arith.constant 0.001953125 : f32
    %31 = vector.broadcast %cst_27 : f32 to vector<8x1xf32>
    %32 = arith.mulf %28, %31 : vector<8x1xf32>
    %33 = arith.mulf %30, %30 : vector<8x1xf32>
    %34 = arith.subf %32, %33 : vector<8x1xf32>
    %c0_28 = arith.constant 0 : index
    %c0_29 = arith.constant 0 : index
    %35 = vector.load %arg3[%c0_28, %c0_29] : memref<8x1xf32, #tpu.memory_space<vmem>>, vector<8x1xf32>
    %cst_30 = arith.constant 9.99999974E-6 : f32
    %36 = vector.broadcast %cst_30 : f32 to vector<8x1xf32>
    %37 = arith.addf %34, %36 : vector<8x1xf32>
    %38 = math.rsqrt %37 : vector<8x1xf32>
    %39 = arith.mulf %35, %38 : vector<8x1xf32>
    %40 = vector.broadcast %30 : vector<8x1xf32> to vector<8x768xf32>
    %41 = arith.subf %21, %40 : vector<8x768xf32>
    %42 = vector.broadcast %39 : vector<8x1xf32> to vector<8x768xf32>
    %43 = arith.mulf %41, %42 : vector<8x768xf32>
    %c0_31 = arith.constant 0 : index
    %c0_32 = arith.constant 0 : index
    %44 = vector.load %arg4[%c0_31, %c0_32] : memref<8x1xf32, #tpu.memory_space<vmem>>, vector<8x1xf32>
    %45 = vector.broadcast %44 : vector<8x1xf32> to vector<8x768xf32>
    %46 = arith.addf %43, %45 : vector<8x768xf32>
    %cst_33 = arith.constant 0.000000e+00 : f32
    %47 = vector.broadcast %cst_33 : f32 to vector<8x768xf32>
    %48 = arith.maximumf %46, %47 : vector<8x768xf32>
    %49 = vector.broadcast %0 : vector<1x768xf32> to vector<8x768xf32>
    %50 = arith.mulf %48, %49 : vector<8x768xf32>
    %cst_34 = arith.constant 0.000000e+00 : f32
    %51 = vector.broadcast %cst_34 : f32 to vector<8x128xf32>
    %c0_35 = arith.constant 0 : index
    %c0_36 = arith.constant 0 : index
    %52 = vector.load %arg10[%c0_35, %c0_36] : memref<8x1024xf32, #tpu.memory_space<vmem>>, vector<8x128xf32>
    tpu.vector_store %arg10[%c0_35, %c0_36], %51 {strides = array<i32>} : memref<8x1024xf32, #tpu.memory_space<vmem>>, vector<8x128xf32>,
    %cst_37 = arith.constant 0.000000e+00 : f32
    %53 = vector.broadcast %cst_37 : f32 to vector<8x128xf32>
    %c0_38 = arith.constant 0 : index
    %c896 = arith.constant 896 : index
    %54 = vector.load %arg10[%c0_38, %c896] : memref<8x1024xf32, #tpu.memory_space<vmem>>, vector<8x128xf32>
    tpu.vector_store %arg10[%c0_38, %c896], %53 {strides = array<i32>} : memref<8x1024xf32, #tpu.memory_space<vmem>>, vector<8x128xf32>,
    %c0_39 = arith.constant 0 : index
    %c128_40 = arith.constant 128 : index
    %55 = vector.load %arg10[%c0_39, %c128_40] : memref<8x1024xf32, #tpu.memory_space<vmem>>, vector<8x768xf32>
    tpu.vector_store %arg10[%c0_39, %c128_40], %50 {strides = array<i32>} : memref<8x1024xf32, #tpu.memory_space<vmem>>, vector<8x768xf32>,
    %c0_41 = arith.constant 0 : index
    %c109_42 = arith.constant 109 : index
    %56 = vector.load %arg10[%c0_41, %c109_42] : memref<8x1024xf32, #tpu.memory_space<vmem>>, vector<8x768xf32>
    %c0_43 = arith.constant 0 : index
    %c0_44 = arith.constant 0 : index
    %57 = vector.load %arg9[%c0_43, %c0_44] : memref<72x768xf32, #tpu.memory_space<vmem>>, vector<8x768xf32>
    tpu.vector_store %arg9[%c0_43, %c0_44], %56 {strides = array<i32>} : memref<72x768xf32, #tpu.memory_space<vmem>>, vector<8x768xf32>,
    %c0_45 = arith.constant 0 : index
    %c110_46 = arith.constant 110 : index
    %58 = vector.load %arg10[%c0_45, %c110_46] : memref<8x1024xf32, #tpu.memory_space<vmem>>, vector<8x768xf32>
    %c8_47 = arith.constant 8 : index
    %c0_48 = arith.constant 0 : index
    %59 = vector.load %arg9[%c8_47, %c0_48] : memref<72x768xf32, #tpu.memory_space<vmem>>, vector<8x768xf32>
    tpu.vector_store %arg9[%c8_47, %c0_48], %58 {strides = array<i32>} : memref<72x768xf32, #tpu.memory_space<vmem>>, vector<8x768xf32>,
    %c0_49 = arith.constant 0 : index
    %c111_50 = arith.constant 111 : index
    %60 = vector.load %arg10[%c0_49, %c111_50] : memref<8x1024xf32, #tpu.memory_space<vmem>>, vector<8x768xf32>
    %c16_51 = arith.constant 16 : index
    %c0_52 = arith.constant 0 : index
    %61 = vector.load %arg9[%c16_51, %c0_52] : memref<72x768xf32, #tpu.memory_space<vmem>>, vector<8x768xf32>
    tpu.vector_store %arg9[%c16_51, %c0_52], %60 {strides = array<i32>} : memref<72x768xf32, #tpu.memory_space<vmem>>, vector<8x768xf32>,
    %c0_53 = arith.constant 0 : index
    %c127_54 = arith.constant 127 : index
    %62 = vector.load %arg10[%c0_53, %c127_54] : memref<8x1024xf32, #tpu.memory_space<vmem>>, vector<8x768xf32>
    %c24_55 = arith.constant 24 : index
    %c0_56 = arith.constant 0 : index
    %63 = vector.load %arg9[%c24_55, %c0_56] : memref<72x768xf32, #tpu.memory_space<vmem>>, vector<8x768xf32>
    tpu.vector_store %arg9[%c24_55, %c0_56], %62 {strides = array<i32>} : memref<72x768xf32, #tpu.memory_space<vmem>>, vector<8x768xf32>,
    %c0_57 = arith.constant 0 : index
    %c128_58 = arith.constant 128 : index
    %64 = vector.load %arg10[%c0_57, %c128_58] : memref<8x1024xf32, #tpu.memory_space<vmem>>, vector<8x768xf32>
    %c32_59 = arith.constant 32 : index
    %c0_60 = arith.constant 0 : index
    %65 = vector.load %arg9[%c32_59, %c0_60] : memref<72x768xf32, #tpu.memory_space<vmem>>, vector<8x768xf32>
    tpu.vector_store %arg9[%c32_59, %c0_60], %64 {strides = array<i32>} : memref<72x768xf32, #tpu.memory_space<vmem>>, vector<8x768xf32>,
    %c0_61 = arith.constant 0 : index
    %c129_62 = arith.constant 129 : index
    %66 = vector.load %arg10[%c0_61, %c129_62] : memref<8x1024xf32, #tpu.memory_space<vmem>>, vector<8x768xf32>
    %c40_63 = arith.constant 40 : index
    %c0_64 = arith.constant 0 : index
    %67 = vector.load %arg9[%c40_63, %c0_64] : memref<72x768xf32, #tpu.memory_space<vmem>>, vector<8x768xf32>
    tpu.vector_store %arg9[%c40_63, %c0_64], %66 {strides = array<i32>} : memref<72x768xf32, #tpu.memory_space<vmem>>, vector<8x768xf32>,
    %c0_65 = arith.constant 0 : index
    %c145_66 = arith.constant 145 : index
    %68 = vector.load %arg10[%c0_65, %c145_66] : memref<8x1024xf32, #tpu.memory_space<vmem>>, vector<8x768xf32>
    %c48_67 = arith.constant 48 : index
    %c0_68 = arith.constant 0 : index
    %69 = vector.load %arg9[%c48_67, %c0_68] : memref<72x768xf32, #tpu.memory_space<vmem>>, vector<8x768xf32>
    tpu.vector_store %arg9[%c48_67, %c0_68], %68 {strides = array<i32>} : memref<72x768xf32, #tpu.memory_space<vmem>>, vector<8x768xf32>,
    %c0_69 = arith.constant 0 : index
    %c146_70 = arith.constant 146 : index
    %70 = vector.load %arg10[%c0_69, %c146_70] : memref<8x1024xf32, #tpu.memory_space<vmem>>, vector<8x768xf32>
    %c56_71 = arith.constant 56 : index
    %c0_72 = arith.constant 0 : index
    %71 = vector.load %arg9[%c56_71, %c0_72] : memref<72x768xf32, #tpu.memory_space<vmem>>, vector<8x768xf32>
    tpu.vector_store %arg9[%c56_71, %c0_72], %70 {strides = array<i32>} : memref<72x768xf32, #tpu.memory_space<vmem>>, vector<8x768xf32>,
    %c0_73 = arith.constant 0 : index
    %c147_74 = arith.constant 147 : index
    %72 = vector.load %arg10[%c0_73, %c147_74] : memref<8x1024xf32, #tpu.memory_space<vmem>>, vector<8x768xf32>
    %c64_75 = arith.constant 64 : index
    %c0_76 = arith.constant 0 : index
    %73 = vector.load %arg9[%c64_75, %c0_76] : memref<72x768xf32, #tpu.memory_space<vmem>>, vector<8x768xf32>
    tpu.vector_store %arg9[%c64_75, %c0_76], %72 {strides = array<i32>} : memref<72x768xf32, #tpu.memory_space<vmem>>, vector<8x768xf32>,
    %c0_77 = arith.constant 0 : index
    %c0_78 = arith.constant 0 : index
    %74 = vector.load %arg5[%c0_77, %c0_78] : memref<8x72xf32, #tpu.memory_space<vmem>>, vector<8x72xf32>
    %c0_79 = arith.constant 0 : index
    %c0_80 = arith.constant 0 : index
    %75 = vector.load %arg9[%c0_79, %c0_80] : memref<72x768xf32, #tpu.memory_space<vmem>>, vector<72x768xf32>
    %cst_81 = arith.constant dense<0.000000e+00> : vector<8x768xf32>
    %76 = tpu.matmul %74, %75, %cst_81 {dimension_numbers = #tpu.dot_dimension_numbers<[1], [0], [0], [1], [0, 0, 1, 1], [], []>} : vector<8x72xf32>, vector<72x768xf32>, vector<8x768xf32> -> vector<8x768xf32>
    %77 = vector.broadcast %0 : vector<1x768xf32> to vector<8x768xf32>
    %78 = arith.mulf %76, %77 : vector<8x768xf32>
    %cst_82 = arith.constant dense<0.000000e+00> : vector<8xf32>
    %79 = vector.multi_reduction <add>, %78, %cst_82 [1] : vector<8x768xf32> to vector<8xf32>
    %80 = vector.shape_cast %79 : vector<8xf32> to vector<8x1xf32>
    %81 = arith.mulf %78, %78 : vector<8x768xf32>
    %cst_83 = arith.constant dense<0.000000e+00> : vector<8xf32>
    %82 = vector.multi_reduction <add>, %81, %cst_83 [1] : vector<8x768xf32> to vector<8xf32>
    %83 = vector.shape_cast %82 : vector<8xf32> to vector<8x1xf32>
    %cst_84 = arith.constant 0.001953125 : f32
    %84 = vector.broadcast %cst_84 : f32 to vector<8x1xf32>
    %85 = arith.mulf %80, %84 : vector<8x1xf32>
    %cst_85 = arith.constant 0.001953125 : f32
    %86 = vector.broadcast %cst_85 : f32 to vector<8x1xf32>
    %87 = arith.mulf %83, %86 : vector<8x1xf32>
    %88 = arith.mulf %85, %85 : vector<8x1xf32>
    %89 = arith.subf %87, %88 : vector<8x1xf32>
    %c0_86 = arith.constant 0 : index
    %c0_87 = arith.constant 0 : index
    %90 = vector.load %arg6[%c0_86, %c0_87] : memref<8x1xf32, #tpu.memory_space<vmem>>, vector<8x1xf32>
    %cst_88 = arith.constant 9.99999974E-6 : f32
    %91 = vector.broadcast %cst_88 : f32 to vector<8x1xf32>
    %92 = arith.addf %89, %91 : vector<8x1xf32>
    %93 = math.rsqrt %92 : vector<8x1xf32>
    %94 = arith.mulf %90, %93 : vector<8x1xf32>
    %95 = vector.broadcast %85 : vector<8x1xf32> to vector<8x768xf32>
    %96 = arith.subf %76, %95 : vector<8x768xf32>
    %97 = vector.broadcast %94 : vector<8x1xf32> to vector<8x768xf32>
    %98 = arith.mulf %96, %97 : vector<8x768xf32>
    %c0_89 = arith.constant 0 : index
    %c0_90 = arith.constant 0 : index
    %99 = vector.load %arg7[%c0_89, %c0_90] : memref<8x1xf32, #tpu.memory_space<vmem>>, vector<8x1xf32>
    %100 = vector.broadcast %99 : vector<8x1xf32> to vector<8x768xf32>
    %101 = arith.addf %98, %100 : vector<8x768xf32>
    %c0_91 = arith.constant 0 : index
    %c128_92 = arith.constant 128 : index
    %102 = vector.load %arg0[%c0_91, %c128_92] : memref<8x1024xf32, #tpu.memory_space<vmem>>, vector<8x768xf32>
    %103 = arith.addf %101, %102 : vector<8x768xf32>
    %cst_93 = arith.constant 0.000000e+00 : f32
    %104 = vector.broadcast %cst_93 : f32 to vector<8x768xf32>
    %105 = arith.maximumf %103, %104 : vector<8x768xf32>
    %c0_94 = arith.constant 0 : index
    %c0_95 = arith.constant 0 : index
    %106 = vector.load %arg8[%c0_94, %c0_95] : memref<8x768xf32, #tpu.memory_space<vmem>>, vector<8x768xf32>
    tpu.vector_store %arg8[%c0_94, %c0_95], %105 {strides = array<i32>} : memref<8x768xf32, #tpu.memory_space<vmem>>, vector<8x768xf32>,
    return
  }
}

</mosaic_0001>

<llo_original>
// kernel: residual_block_forward.1
$region0: #{residual_block_forward.1}
  #allocation0 [shape = 'u32[]', space=smem, size = 0x4, offset = 0x4, fixed_abs, tag = 'smem constant byte address 0x4 - core index']
  #allocation1 [shape = 'u32[144,128]{1,0:T(1,128)}', space=vmem, size = 0x12000, scoped, tag = 'internal scratch']
  #allocation2 [shape = 'f32[72,768]{1,0:T(8,128)}', space=vmem, size = 0x36000, scoped, tag = 'scratch operand']
  #allocation3 [shape = 'f32[8,1024]{1,0:T(8,128)}', space=vmem, size = 0x8000, scoped, tag = 'scratch operand']
  %s0 = inlined_call_operand.vmem [shape: f32[8,1024], index: 0, kind: input, shape index: {}]
  %s1 = inlined_call_operand.vmem [shape: f32[1,768], index: 1, kind: input, shape index: {}]
  %s2 = inlined_call_operand.vmem [shape: f32[8,72], index: 2, kind: input, shape index: {}]
  %s3 = inlined_call_operand.vmem [shape: f32[8,1], index: 3, kind: input, shape index: {}]
  %s4 = inlined_call_operand.vmem [shape: f32[8,1], index: 4, kind: input, shape index: {}]
  %s5 = inlined_call_operand.vmem [shape: f32[8,72], index: 5, kind: input, shape index: {}]
  %s6 = inlined_call_operand.vmem [shape: f32[8,1], index: 6, kind: input, shape index: {}]
  %s7 = inlined_call_operand.vmem [shape: f32[8,1], index: 7, kind: input, shape index: {}]
  %s8 = inlined_call_operand.vmem [shape: f32[8,768], index: 8, kind: output, shape index: {}]
  %s9 = sld [smem:[#allocation0]]
  $region42: #{residual_block_forward.1} parent=0
    _
  %s11 = ssub.s32 1, %s9
  %s12 = scalar_select 0, %s11, %s9
  // Predicated region
  $region2: #{residual_block_forward.1} parent=0 // pred_check
    _
  $region3: #{residual_block_forward.1} parent=0 // pred_check_branch
    %14 = sbr.rel (0) target = $region5
  $region4: #{residual_block_forward.1} parent=0 // pred_region
    _
  $region5: #{residual_block_forward.1} parent=0 // pred_fallthru
    _
  // Predicated region
  $region6: #{residual_block_forward.1} parent=0 // pred_check
    _
  $region7: #{residual_block_forward.1} parent=0 // pred_check_branch
    %16 = sbr.rel (0) target = $region9
  $region8: #{residual_block_forward.1} parent=0 // pred_region
    _
  $region9: #{residual_block_forward.1} parent=0 // pred_fallthru
    _
  // Predicated region
  $region10: #{residual_block_forward.1} parent=0 // pred_check
    _
  $region11: #{residual_block_forward.1} parent=0 // pred_check_branch
    %18 = sbr.rel (0) target = $region13
  $region12: #{residual_block_forward.1} parent=0 // pred_region
    _
  $region13: #{residual_block_forward.1} parent=0 // pred_fallthru
    _
  // Predicated region
  $region14: #{residual_block_forward.1} parent=0 // pred_check
    _
  $region15: #{residual_block_forward.1} parent=0 // pred_check_branch
    %20 = sbr.rel (0) target = $region17
  $region16: #{residual_block_forward.1} parent=0 // pred_region
    _
  $region17: #{residual_block_forward.1} parent=0 // pred_fallthru
    _
  // Predicated region
  $region18: #{residual_block_forward.1} parent=0 // pred_check
    _
  $region19: #{residual_block_forward.1} parent=0 // pred_check_branch
    %22 = sbr.rel (0) target = $region21
  $region20: #{residual_block_forward.1} parent=0 // pred_region
    _
  $region21: #{residual_block_forward.1} parent=0 // pred_fallthru
    _
  // Predicated region
  $region22: #{residual_block_forward.1} parent=0 // pred_check
    _
  $region23: #{residual_block_forward.1} parent=0 // pred_check_branch
    %24 = sbr.rel (0) target = $region25
  $region24: #{residual_block_forward.1} parent=0 // pred_region
    _
  $region25: #{residual_block_forward.1} parent=0 // pred_fallthru
    _
  // Predicated region
  $region26: #{residual_block_forward.1} parent=0 // pred_check
    _
  $region27: #{residual_block_forward.1} parent=0 // pred_check_branch
    %26 = sbr.rel (0) target = $region29
  $region28: #{residual_block_forward.1} parent=0 // pred_region
    _
  $region29: #{residual_block_forward.1} parent=0 // pred_fallthru
    _
  // Predicated region
  $region30: #{residual_block_forward.1} parent=0 // pred_check
    _
  $region31: #{residual_block_forward.1} parent=0 // pred_check_branch
    %28 = sbr.rel (0) target = $region33
  $region32: #{residual_block_forward.1} parent=0 // pred_region
    _
  $region33: #{residual_block_forward.1} parent=0 // pred_fallthru
    _
  %v29 = vld [vmem:[%s1] sm:$0x3f]
  %v30 = vld [vmem:[%s0] sm:$0xff]
  %v31 = vld [vmem:[%s0 + $0x8] sm:$0xff]
  %v32 = vld [vmem:[%s0 + $0x10] sm:$0xff]
  %v33 = vld [vmem:[%s0 + $0x18] sm:$0xff]
  %v34 = vld [vmem:[%s0 + $0x20] sm:$0xff]
  %v35 = vld [vmem:[%s0 + $0x28] sm:$0xff]
  %v36 = vld [vmem:[%s0 + $0x30] sm:$0xff]
  %44 = vrot.lane.b32.xlu0 %v30, 19
  %v45 = vpop.permute.xlu0 %44
  %46 = vrot.lane.b32.xlu0 %v31, 19
  %v47 = vpop.permute.xlu0 %46
  %48 = vrot.lane.b32.xlu0 %v32, 19
  %v49 = vpop.permute.xlu0 %48
  %50 = vrot.lane.b32.xlu0 %v33, 19
  %v51 = vpop.permute.xlu0 %50
  %52 = vrot.lane.b32.xlu0 %v34, 19
  %v53 = vpop.permute.xlu0 %52
  %54 = vrot.lane.b32.xlu0 %v35, 19
  %v55 = vpop.permute.xlu0 %54
  %56 = vrot.lane.b32.xlu0 %v36, 19
  %v57 = vpop.permute.xlu0 %56
  %vm58 = vcmask 154624
  %v59 = vsel %vm58, %v45, %v47
  %v60 = vsel %vm58, %v47, %v49
  %v61 = vsel %vm58, %v49, %v51
  %v62 = vsel %vm58, %v51, %v53
  %v63 = vsel %vm58, %v53, %v55
  %v64 = vsel %vm58, %v55, %v57
  %71 = vst [vmem:[#allocation2] sm:$0xff] %v59
  %72 = vst [vmem:[#allocation2 + $0x8] sm:$0xff] %v60
  %73 = vst [vmem:[#allocation2 + $0x10] sm:$0xff] %v61
  %74 = vst [vmem:[#allocation2 + $0x18] sm:$0xff] %v62
  %75 = vst [vmem:[#allocation2 + $0x20] sm:$0xff] %v63
  %76 = vst [vmem:[#allocation2 + $0x28] sm:$0xff] %v64
  %v77 = vld [vmem:[%s0] sm:$0xff]
  %v78 = vld [vmem:[%s0 + $0x8] sm:$0xff]
  %v79 = vld [vmem:[%s0 + $0x10] sm:$0xff]
  %v80 = vld [vmem:[%s0 + $0x18] sm:$0xff]
  %v81 = vld [vmem:[%s0 + $0x20] sm:$0xff]
  %v82 = vld [vmem:[%s0 + $0x28] sm:$0xff]
  %v83 = vld [vmem:[%s0 + $0x30] sm:$0xff]
  %91 = vrot.lane.b32.xlu0 %v77, 18
  %v92 = vpop.permute.xlu0 %91
  %93 = vrot.lane.b32.xlu0 %v78, 18
  %v94 = vpop.permute.xlu0 %93
  %95 = vrot.lane.b32.xlu0 %v79, 18
  %v96 = vpop.permute.xlu0 %95
  %97 = vrot.lane.b32.xlu0 %v80, 18
  %v98 = vpop.permute.xlu0 %97
  %99 = vrot.lane.b32.xlu0 %v81, 18
  %v100 = vpop.permute.xlu0 %99
  %101 = vrot.lane.b32.xlu0 %v82, 18
  %v102 = vpop.permute.xlu0 %101
  %103 = vrot.lane.b32.xlu0 %v83, 18
  %v104 = vpop.permute.xlu0 %103
  %vm105 = vcmask 146432
  %v106 = vsel %vm105, %v92, %v94
  %v107 = vsel %vm105, %v94, %v96
  %v108 = vsel %vm105, %v96, %v98
  %v109 = vsel %vm105, %v98, %v100
  %v110 = vsel %vm105, %v100, %v102
  %v111 = vsel %vm105, %v102, %v104
  %118 = vst [vmem:[#allocation2 + $0x30] sm:$0xff] %v106
  %119 = vst [vmem:[#allocation2 + $0x38] sm:$0xff] %v107
  %120 = vst [vmem:[#allocation2 + $0x40] sm:$0xff] %v108
  %121 = vst [vmem:[#allocation2 + $0x48] sm:$0xff] %v109
  %122 = vst [vmem:[#allocation2 + $0x50] sm:$0xff] %v110
  %123 = vst [vmem:[#allocation2 + $0x58] sm:$0xff] %v111
  %v124 = vld [vmem:[%s0] sm:$0xff]
  %v125 = vld [vmem:[%s0 + $0x8] sm:$0xff]
  %v126 = vld [vmem:[%s0 + $0x10] sm:$0xff]
  %v127 = vld [vmem:[%s0 + $0x18] sm:$0xff]
  %v128 = vld [vmem:[%s0 + $0x20] sm:$0xff]
  %v129 = vld [vmem:[%s0 + $0x28] sm:$0xff]
  %v130 = vld [vmem:[%s0 + $0x30] sm:$0xff]
  %138 = vrot.lane.b32.xlu0 %v124, 17
  %v139 = vpop.permute.xlu0 %138
  %140 = vrot.lane.b32.xlu0 %v125, 17
  %v141 = vpop.permute.xlu0 %140
  %142 = vrot.lane.b32.xlu0 %v126, 17
  %v143 = vpop.permute.xlu0 %142
  %144 = vrot.lane.b32.xlu0 %v127, 17
  %v145 = vpop.permute.xlu0 %144
  %146 = vrot.lane.b32.xlu0 %v128, 17
  %v147 = vpop.permute.xlu0 %146
  %148 = vrot.lane.b32.xlu0 %v129, 17
  %v149 = vpop.permute.xlu0 %148
  %150 = vrot.lane.b32.xlu0 %v130, 17
  %v151 = vpop.permute.xlu0 %150
  %vm152 = vcmask 138240
  %v153 = vsel %vm152, %v139, %v141
  %v154 = vsel %vm152, %v141, %v143
  %v155 = vsel %vm152, %v143, %v145
  %v156 = vsel %vm152, %v145, %v147
  %v157 = vsel %vm152, %v147, %v149
  %v158 = vsel %vm152, %v149, %v151
  %165 = vst [vmem:[#allocation2 + $0x60] sm:$0xff] %v153
  %166 = vst [vmem:[#allocation2 + $0x68] sm:$0xff] %v154
  %167 = vst [vmem:[#allocation2 + $0x70] sm:$0xff] %v155
  %168 = vst [vmem:[#allocation2 + $0x78] sm:$0xff] %v156
  %169 = vst [vmem:[#allocation2 + $0x80] sm:$0xff] %v157
  %170 = vst [vmem:[#allocation2 + $0x88] sm:$0xff] %v158
  %v171 = vld [vmem:[%s0] sm:$0xff]
  %v172 = vld [vmem:[%s0 + $0x8] sm:$0xff]
  %v173 = vld [vmem:[%s0 + $0x10] sm:$0xff]
  %v174 = vld [vmem:[%s0 + $0x18] sm:$0xff]
  %v175 = vld [vmem:[%s0 + $0x20] sm:$0xff]
  %v176 = vld [vmem:[%s0 + $0x28] sm:$0xff]
  %v177 = vld [vmem:[%s0 + $0x30] sm:$0xff]
  %185 = vrot.lane.b32.xlu0 %v171, 1
  %v186 = vpop.permute.xlu0 %185
  %187 = vrot.lane.b32.xlu0 %v172, 1
  %v188 = vpop.permute.xlu0 %187
  %189 = vrot.lane.b32.xlu0 %v173, 1
  %v190 = vpop.permute.xlu0 %189
  %191 = vrot.lane.b32.xlu0 %v174, 1
  %v192 = vpop.permute.xlu0 %191
  %193 = vrot.lane.b32.xlu0 %v175, 1
  %v194 = vpop.permute.xlu0 %193
  %195 = vrot.lane.b32.xlu0 %v176, 1
  %v196 = vpop.permute.xlu0 %195
  %197 = vrot.lane.b32.xlu0 %v177, 1
  %v198 = vpop.permute.xlu0 %197
  %vm199 = vcmask 7168
  %v200 = vsel %vm199, %v186, %v188
  %v201 = vsel %vm199, %v188, %v190
  %v202 = vsel %vm199, %v190, %v192
  %v203 = vsel %vm199, %v192, %v194
  %v204 = vsel %vm199, %v194, %v196
  %v205 = vsel %vm199, %v196, %v198
  %212 = vst [vmem:[#allocation2 + $0x90] sm:$0xff] %v200
  %213 = vst [vmem:[#allocation2 + $0x98] sm:$0xff] %v201
  %214 = vst [vmem:[#allocation2 + $0xa0] sm:$0xff] %v202
  %215 = vst [vmem:[#allocation2 + $0xa8] sm:$0xff] %v203
  %216 = vst [vmem:[#allocation2 + $0xb0] sm:$0xff] %v204
  %217 = vst [vmem:[#allocation2 + $0xb8] sm:$0xff] %v205
  %v218 = vld [vmem:[%s0 + $0x8] sm:$0xff]
  %v219 = vld [vmem:[%s0 + $0x10] sm:$0xff]
  %v220 = vld [vmem:[%s0 + $0x18] sm:$0xff]
  %v221 = vld [vmem:[%s0 + $0x20] sm:$0xff]
  %v222 = vld [vmem:[%s0 + $0x28] sm:$0xff]
  %v223 = vld [vmem:[%s0 + $0x30] sm:$0xff]
  %224 = vst [vmem:[#allocation2 + $0xc0] sm:$0xff] %v218
  %225 = vst [vmem:[#allocation2 + $0xc8] sm:$0xff] %v219
  %226 = vst [vmem:[#allocation2 + $0xd0] sm:$0xff] %v220
  %227 = vst [vmem:[#allocation2 + $0xd8] sm:$0xff] %v221
  %228 = vst [vmem:[#allocation2 + $0xe0] sm:$0xff] %v222
  %229 = vst [vmem:[#allocation2 + $0xe8] sm:$0xff] %v223
  %v230 = vld [vmem:[%s0 + $0x8] sm:$0xff]
  %v231 = vld [vmem:[%s0 + $0x10] sm:$0xff]
  %v232 = vld [vmem:[%s0 + $0x18] sm:$0xff]
  %v233 = vld [vmem:[%s0 + $0x20] sm:$0xff]
  %v234 = vld [vmem:[%s0 + $0x28] sm:$0xff]
  %v235 = vld [vmem:[%s0 + $0x30] sm:$0xff]
  %v236 = vld [vmem:[%s0 + $0x38] sm:$0xff]
  %244 = vrot.lane.b32.xlu0 %v230, 127
  %v245 = vpop.permute.xlu0 %244
  %246 = vrot.lane.b32.xlu0 %v231, 127
  %v247 = vpop.permute.xlu0 %246
  %248 = vrot.lane.b32.xlu0 %v232, 127
  %v249 = vpop.permute.xlu0 %248
  %250 = vrot.lane.b32.xlu0 %v233, 127
  %v251 = vpop.permute.xlu0 %250
  %252 = vrot.lane.b32.xlu0 %v234, 127
  %v253 = vpop.permute.xlu0 %252
  %254 = vrot.lane.b32.xlu0 %v235, 127
  %v255 = vpop.permute.xlu0 %254
  %256 = vrot.lane.b32.xlu0 %v236, 127
  %v257 = vpop.permute.xlu0 %256
  %vm258 = vcmask 1039360
  %v259 = vsel %vm258, %v245, %v247
  %v260 = vsel %vm258, %v247, %v249
  %v261 = vsel %vm258, %v249, %v251
  %v262 = vsel %vm258, %v251, %v253
  %v263 = vsel %vm258, %v253, %v255
  %v264 = vsel %vm258, %v255, %v257
  %271 = vst [vmem:[#allocation2 + $0xf0] sm:$0xff] %v259
  %272 = vst [vmem:[#allocation2 + $0xf8] sm:$0xff] %v260
  %273 = vst [vmem:[#allocation2 + $0x100] sm:$0xff] %v261
  %274 = vst [vmem:[#allocation2 + $0x108] sm:$0xff] %v262
  %275 = vst [vmem:[#allocation2 + $0x110] sm:$0xff] %v263
  %276 = vst [vmem:[#allocation2 + $0x118] sm:$0xff] %v264
  %v277 = vld [vmem:[%s0 + $0x8] sm:$0xff]
  %v278 = vld [vmem:[%s0 + $0x10] sm:$0xff]
  %v279 = vld [vmem:[%s0 + $0x18] sm:$0xff]
  %v280 = vld [vmem:[%s0 + $0x20] sm:$0xff]
  %v281 = vld [vmem:[%s0 + $0x28] sm:$0xff]
  %v282 = vld [vmem:[%s0 + $0x30] sm:$0xff]
  %v283 = vld [vmem:[%s0 + $0x38] sm:$0xff]
  %291 = vrot.lane.b32.xlu0 %v277, 111
  %v292 = vpop.permute.xlu0 %291
  %293 = vrot.lane.b32.xlu0 %v278, 111
  %v294 = vpop.permute.xlu0 %293
  %295 = vrot.lane.b32.xlu0 %v279, 111
  %v296 = vpop.permute.xlu0 %295
  %297 = vrot.lane.b32.xlu0 %v280, 111
  %v298 = vpop.permute.xlu0 %297
  %299 = vrot.lane.b32.xlu0 %v281, 111
  %v300 = vpop.permute.xlu0 %299
  %301 = vrot.lane.b32.xlu0 %v282, 111
  %v302 = vpop.permute.xlu0 %301
  %303 = vrot.lane.b32.xlu0 %v283, 111
  %v304 = vpop.permute.xlu0 %303
  %vm305 = vcmask 908288
  %v306 = vsel %vm305, %v292, %v294
  %v307 = vsel %vm305, %v294, %v296
  %v308 = vsel %vm305, %v296, %v298
  %v309 = vsel %vm305, %v298, %v300
  %v310 = vsel %vm305, %v300, %v302
  %v311 = vsel %vm305, %v302, %v304
  %318 = vst [vmem:[#allocation2 + $0x120] sm:$0xff] %v306
  %319 = vst [vmem:[#allocation2 + $0x128] sm:$0xff] %v307
  %320 = vst [vmem:[#allocation2 + $0x130] sm:$0xff] %v308
  %321 = vst [vmem:[#allocation2 + $0x138] sm:$0xff] %v309
  %322 = vst [vmem:[#allocation2 + $0x140] sm:$0xff] %v310
  %323 = vst [vmem:[#allocation2 + $0x148] sm:$0xff] %v311
  %v324 = vld [vmem:[%s0 + $0x8] sm:$0xff]
  %v325 = vld [vmem:[%s0 + $0x10] sm:$0xff]
  %v326 = vld [vmem:[%s0 + $0x18] sm:$0xff]
  %v327 = vld [vmem:[%s0 + $0x20] sm:$0xff]
  %v328 = vld [vmem:[%s0 + $0x28] sm:$0xff]
  %v329 = vld [vmem:[%s0 + $0x30] sm:$0xff]
  %v330 = vld [vmem:[%s0 + $0x38] sm:$0xff]
  %338 = vrot.lane.b32.xlu0 %v324, 110
  %v339 = vpop.permute.xlu0 %338
  %340 = vrot.lane.b32.xlu0 %v325, 110
  %v341 = vpop.permute.xlu0 %340
  %342 = vrot.lane.b32.xlu0 %v326, 110
  %v343 = vpop.permute.xlu0 %342
  %344 = vrot.lane.b32.xlu0 %v327, 110
  %v345 = vpop.permute.xlu0 %344
  %346 = vrot.lane.b32.xlu0 %v328, 110
  %v347 = vpop.permute.xlu0 %346
  %348 = vrot.lane.b32.xlu0 %v329, 110
  %v349 = vpop.permute.xlu0 %348
  %350 = vrot.lane.b32.xlu0 %v330, 110
  %v351 = vpop.permute.xlu0 %350
  %vm352 = vcmask 900096
  %v353 = vsel %vm352, %v339, %v341
  %v354 = vsel %vm352, %v341, %v343
  %v355 = vsel %vm352, %v343, %v345
  %v356 = vsel %vm352, %v345, %v347
  %v357 = vsel %vm352, %v347, %v349
  %v358 = vsel %vm352, %v349, %v351
  %365 = vst [vmem:[#allocation2 + $0x150] sm:$0xff] %v353
  %366 = vst [vmem:[#allocation2 + $0x158] sm:$0xff] %v354
  %367 = vst [vmem:[#allocation2 + $0x160] sm:$0xff] %v355
  %368 = vst [vmem:[#allocation2 + $0x168] sm:$0xff] %v356
  %369 = vst [vmem:[#allocation2 + $0x170] sm:$0xff] %v357
  %370 = vst [vmem:[#allocation2 + $0x178] sm:$0xff] %v358
  %v371 = vld [vmem:[%s0 + $0x8] sm:$0xff]
  %v372 = vld [vmem:[%s0 + $0x10] sm:$0xff]
  %v373 = vld [vmem:[%s0 + $0x18] sm:$0xff]
  %v374 = vld [vmem:[%s0 + $0x20] sm:$0xff]
  %v375 = vld [vmem:[%s0 + $0x28] sm:$0xff]
  %v376 = vld [vmem:[%s0 + $0x30] sm:$0xff]
  %v377 = vld [vmem:[%s0 + $0x38] sm:$0xff]
  %385 = vrot.lane.b32.xlu0 %v371, 109
  %v386 = vpop.permute.xlu0 %385
  %387 = vrot.lane.b32.xlu0 %v372, 109
  %v388 = vpop.permute.xlu0 %387
  %389 = vrot.lane.b32.xlu0 %v373, 109
  %v390 = vpop.permute.xlu0 %389
  %391 = vrot.lane.b32.xlu0 %v374, 109
  %v392 = vpop.permute.xlu0 %391
  %393 = vrot.lane.b32.xlu0 %v375, 109
  %v394 = vpop.permute.xlu0 %393
  %395 = vrot.lane.b32.xlu0 %v376, 109
  %v396 = vpop.permute.xlu0 %395
  %397 = vrot.lane.b32.xlu0 %v377, 109
  %v398 = vpop.permute.xlu0 %397
  %vm399 = vcmask 891904
  %v400 = vsel %vm399, %v386, %v388
  %v401 = vsel %vm399, %v388, %v390
  %v402 = vsel %vm399, %v390, %v392
  %v403 = vsel %vm399, %v392, %v394
  %v404 = vsel %vm399, %v394, %v396
  %v405 = vsel %vm399, %v396, %v398
  %412 = vst [vmem:[#allocation2 + $0x180] sm:$0xff] %v400
  %413 = vst [vmem:[#allocation2 + $0x188] sm:$0xff] %v401
  %414 = vst [vmem:[#allocation2 + $0x190] sm:$0xff] %v402
  %415 = vst [vmem:[#allocation2 + $0x198] sm:$0xff] %v403
  %416 = vst [vmem:[#allocation2 + $0x1a0] sm:$0xff] %v404
  %417 = vst [vmem:[#allocation2 + $0x1a8] sm:$0xff] %v405
  %v418 = vld [vmem:[%s2] sm:$0xff]
  %v419 = vld [vmem:[#allocation2] sm:$0xff]
  %v420 = vld [vmem:[#allocation2 + $0x8] sm:$0xff]
  %v421 = vld [vmem:[#allocation2 + $0x10] sm:$0xff]
  %v422 = vld [vmem:[#allocation2 + $0x18] sm:$0xff]
  %v423 = vld [vmem:[#allocation2 + $0x20] sm:$0xff]
  %v424 = vld [vmem:[#allocation2 + $0x28] sm:$0xff]
  %v425 = vld [vmem:[#allocation2 + $0x30] sm:$0xff]
  %v426 = vld [vmem:[#allocation2 + $0x38] sm:$0xff]
  %v427 = vld [vmem:[#allocation2 + $0x40] sm:$0xff]
  %v428 = vld [vmem:[#allocation2 + $0x48] sm:$0xff]
  %v429 = vld [vmem:[#allocation2 + $0x50] sm:$0xff]
  %v430 = vld [vmem:[#allocation2 + $0x58] sm:$0xff]
  %v431 = vld [vmem:[#allocation2 + $0x60] sm:$0xff]
  %v432 = vld [vmem:[#allocation2 + $0x68] sm:$0xff]
  %v433 = vld [vmem:[#allocation2 + $0x70] sm:$0xff]
  %v434 = vld [vmem:[#allocation2 + $0x78] sm:$0xff]
  %v435 = vld [vmem:[#allocation2 + $0x80] sm:$0xff]
  %v436 = vld [vmem:[#allocation2 + $0x88] sm:$0xff]
  %v437 = vld [vmem:[#allocation2 + $0x90] sm:$0xff]
  %v438 = vld [vmem:[#allocation2 + $0x98] sm:$0xff]
  %v439 = vld [vmem:[#allocation2 + $0xa0] sm:$0xff]
  %v440 = vld [vmem:[#allocation2 + $0xa8] sm:$0xff]
  %v441 = vld [vmem:[#allocation2 + $0xb0] sm:$0xff]
  %v442 = vld [vmem:[#allocation2 + $0xb8] sm:$0xff]
  %v443 = vld [vmem:[#allocation2 + $0xc0] sm:$0xff]
  %v444 = vld [vmem:[#allocation2 + $0xc8] sm:$0xff]
  %v445 = vld [vmem:[#allocation2 + $0xd0] sm:$0xff]
  %v446 = vld [vmem:[#allocation2 + $0xd8] sm:$0xff]
  %v447 = vld [vmem:[#allocation2 + $0xe0] sm:$0xff]
  %v448 = vld [vmem:[#allocation2 + $0xe8] sm:$0xff]
  %v449 = vld [vmem:[#allocation2 + $0xf0] sm:$0xff]
  %v450 = vld [vmem:[#allocation2 + $0xf8] sm:$0xff]
  %v451 = vld [vmem:[#allocation2 + $0x100] sm:$0xff]
  %v452 = vld [vmem:[#allocation2 + $0x108] sm:$0xff]
  %v453 = vld [vmem:[#allocation2 + $0x110] sm:$0xff]
  %v454 = vld [vmem:[#allocation2 + $0x118] sm:$0xff]
  %v455 = vld [vmem:[#allocation2 + $0x120] sm:$0xff]
  %v456 = vld [vmem:[#allocation2 + $0x128] sm:$0xff]
  %v457 = vld [vmem:[#allocation2 + $0x130] sm:$0xff]
  %v458 = vld [vmem:[#allocation2 + $0x138] sm:$0xff]
  %v459 = vld [vmem:[#allocation2 + $0x140] sm:$0xff]
  %v460 = vld [vmem:[#allocation2 + $0x148] sm:$0xff]
  %v461 = vld [vmem:[#allocation2 + $0x150] sm:$0xff]
  %v462 = vld [vmem:[#allocation2 + $0x158] sm:$0xff]
  %v463 = vld [vmem:[#allocation2 + $0x160] sm:$0xff]
  %v464 = vld [vmem:[#allocation2 + $0x168] sm:$0xff]
  %v465 = vld [vmem:[#allocation2 + $0x170] sm:$0xff]
  %v466 = vld [vmem:[#allocation2 + $0x178] sm:$0xff]
  %v467 = vld [vmem:[#allocation2 + $0x180] sm:$0xff]
  %v468 = vld [vmem:[#allocation2 + $0x188] sm:$0xff]
  %v469 = vld [vmem:[#allocation2 + $0x190] sm:$0xff]
  %v470 = vld [vmem:[#allocation2 + $0x198] sm:$0xff]
  %v471 = vld [vmem:[#allocation2 + $0x1a0] sm:$0xff]
  %v472 = vld [vmem:[#allocation2 + $0x1a8] sm:$0xff]
  %vm473 = vcmask 588800
  %v475 = vsel %vm473, %v418, 0
  %477 = vmatprep.subr.mxu0 %v420
  %478 = vmatpush1.msra.mxu0 %v419
  %479 = vmatprep.subr.mxu0 %v426
  %480 = vmatpush1.msra.mxu0 %v425
  %481 = vmatprep.subr.mxu0 %v432
  %482 = vmatpush1.msra.mxu0 %v431
  %483 = vmatprep.subr.mxu0 %v438
  %484 = vmatpush1.msra.mxu0 %v437
  %485 = vmatprep.subr.mxu0 %v444
  %486 = vmatpush1.msra.mxu0 %v443
  %487 = vmatprep.subr.mxu0 %v450
  %488 = vmatpush1.msra.mxu0 %v449
  %489 = vmatprep.subr.mxu0 %v456
  %490 = vmatpush1.msra.mxu0 %v455
  %491 = vmatprep.subr.mxu0 %v462
  %492 = vmatpush1.msra.mxu0 %v461
  %493 = vmatprep.subr.mxu0 %v468
  %494 = vmatpush1.msra.mxu0 %v467
  %495 = vmatprep.subr.mxu0 0.0
  %496 = vmatpush1.msra.mxu0 0.0
  %497 = vmatprep.subr.mxu0 0.0
  %498 = vmatpush1.msra.mxu0 0.0
  %499 = vmatprep.subr.mxu0 0.0
  %500 = vmatpush1.msra.mxu0 0.0
  %501 = vmatprep.subr.mxu0 0.0
  %502 = vmatpush1.msra.mxu0 0.0
  %503 = vmatprep.subr.mxu0 0.0
  %504 = vmatpush1.msra.mxu0 0.0
  %505 = vmatprep.subr.mxu0 0.0
  %506 = vmatpush1.msra.mxu0 0.0
  %507 = vmatprep.subr.mxu0 0.0
  %508 = vmatpush1.msra.mxu0 0.0
  %509 = vmatprep.subr.mxu0 0.0
  %510 = vmatpush1.msra.mxu0 0.0
  %511 = vmatprep.subr.mxu0 0.0
  %512 = vmatpush1.msra.mxu0 0.0
  %513 = vmatprep.subr.mxu0 0.0
  %514 = vmatpush1.msra.mxu0 0.0
  %515 = vmatprep.subr.mxu0 0.0
  %516 = vmatpush1.msra.mxu0 0.0
  %517 = vmatprep.subr.mxu0 0.0
  %518 = vmatpush1.msra.mxu0 0.0
  %519 = vmatprep.subr.mxu0 0.0
  %520 = vmatpush1.msra.mxu0 0.0
  %521 = vmatprep.subr.mxu0 0.0
  %522 = vmatpush1.msra.mxu0 0.0
  %523 = vmatprep.subr.mxu0 0.0
  %524 = vmatpush1.msra.mxu0 0.0
  %525 = vmatprep.subr.mxu0 0.0
  %526 = vmatpush1.msra.mxu0 0.0
  %527 = vmatprep.subr.mxu0 0.0
  %528 = vmatpush1.msra.mxu0 0.0
  %529 = vmatprep.subr.mxu0 0.0
  %530 = vmatpush1.msra.mxu0 0.0
  %531 = vmatprep.subr.mxu0 0.0
  %532 = vmatpush1.msra.mxu0 0.0
  %533 = vmatprep.subr.mxu0 0.0
  %534 = vmatpush1.msra.mxu0 0.0
  %535 = vmatprep.subr.mxu0 0.0
  %536 = vmatpush1.msra.mxu0 0.0
  %537 = vmatprep.subr.mxu0 0.0
  %538 = vmatpush1.msra.mxu0 0.0
  %539 = vmatprep.subr.mxu0 0.0
  %540 = vmatpush1.msra.mxu0 0.0
  %541 = vmatprep.mubr.f32.mxu0 0.0
  %542 = vmatmul.mubr.f32.gmra.mrb[0].mxu0 %v475
  %v543 = vpop.f32.mrb[0].mxu0
  %v544 = vadd.f32 0.0, %v543
  %v545 = vpop.f32.mrb[0].mxu0
  %v546 = vadd.f32 0.0, %v545
  %547 = vdwg.mxu0
  %548 = vmatprep.subr.mxu0 %v422
  %549 = vmatpush1.msra.mxu0 %v421
  %550 = vmatprep.subr.mxu0 %v428
  %551 = vmatpush1.msra.mxu0 %v427
  %552 = vmatprep.subr.mxu0 %v434
  %553 = vmatpush1.msra.mxu0 %v433
  %554 = vmatprep.subr.mxu0 %v440
  %555 = vmatpush1.msra.mxu0 %v439
  %556 = vmatprep.subr.mxu0 %v446
  %557 = vmatpush1.msra.mxu0 %v445
  %558 = vmatprep.subr.mxu0 %v452
  %559 = vmatpush1.msra.mxu0 %v451
  %560 = vmatprep.subr.mxu0 %v458
  %561 = vmatpush1.msra.mxu0 %v457
  %562 = vmatprep.subr.mxu0 %v464
  %563 = vmatpush1.msra.mxu0 %v463
  %564 = vmatprep.subr.mxu0 %v470
  %565 = vmatpush1.msra.mxu0 %v469
  %566 = vmatprep.subr.mxu0 0.0
  %567 = vmatpush1.msra.mxu0 0.0
  %568 = vmatprep.subr.mxu0 0.0
  %569 = vmatpush1.msra.mxu0 0.0
  %570 = vmatprep.subr.mxu0 0.0
  %571 = vmatpush1.msra.mxu0 0.0
  %572 = vmatprep.subr.mxu0 0.0
  %573 = vmatpush1.msra.mxu0 0.0
  %574 = vmatprep.subr.mxu0 0.0
  %575 = vmatpush1.msra.mxu0 0.0
  %576 = vmatprep.subr.mxu0 0.0
  %577 = vmatpush1.msra.mxu0 0.0
  %578 = vmatprep.subr.mxu0 0.0
  %579 = vmatpush1.msra.mxu0 0.0
  %580 = vmatprep.subr.mxu0 0.0
  %581 = vmatpush1.msra.mxu0 0.0
  %582 = vmatprep.subr.mxu0 0.0
  %583 = vmatpush1.msra.mxu0 0.0
  %584 = vmatprep.subr.mxu0 0.0
  %585 = vmatpush1.msra.mxu0 0.0
  %586 = vmatprep.subr.mxu0 0.0
  %587 = vmatpush1.msra.mxu0 0.0
  %588 = vmatprep.subr.mxu0 0.0
  %589 = vmatpush1.msra.mxu0 0.0
  %590 = vmatprep.subr.mxu0 0.0
  %591 = vmatpush1.msra.mxu0 0.0
  %592 = vmatprep.subr.mxu0 0.0
  %593 = vmatpush1.msra.mxu0 0.0
  %594 = vmatprep.subr.mxu0 0.0
  %595 = vmatpush1.msra.mxu0 0.0
  %596 = vmatprep.subr.mxu0 0.0
  %597 = vmatpush1.msra.mxu0 0.0
  %598 = vmatprep.subr.mxu0 0.0
  %599 = vmatpush1.msra.mxu0 0.0
  %600 = vmatprep.subr.mxu0 0.0
  %601 = vmatpush1.msra.mxu0 0.0
  %602 = vmatprep.subr.mxu0 0.0
  %603 = vmatpush1.msra.mxu0 0.0
  %604 = vmatprep.subr.mxu0 0.0
  %605 = vmatpush1.msra.mxu0 0.0
  %606 = vmatprep.subr.mxu0 0.0
  %607 = vmatpush1.msra.mxu0 0.0
  %608 = vmatprep.subr.mxu0 0.0
  %609 = vmatpush1.msra.mxu0 0.0
  %610 = vmatprep.subr.mxu0 0.0
  %611 = vmatpush1.msra.mxu0 0.0
  %612 = vmatprep.mubr.f32.mxu0 0.0
  %613 = vmatmul.mubr.f32.gmra.mrb[0].mxu0 %v475
  %v614 = vpop.f32.mrb[0].mxu0
  %v615 = vadd.f32 0.0, %v614
  %v616 = vpop.f32.mrb[0].mxu0
  %v617 = vadd.f32 0.0, %v616
  %618 = vdwg.mxu0
  %619 = vmatprep.subr.mxu0 %v424
  %620 = vmatpush1.msra.mxu0 %v423
  %621 = vmatprep.subr.mxu0 %v430
  %622 = vmatpush1.msra.mxu0 %v429
  %623 = vmatprep.subr.mxu0 %v436
  %624 = vmatpush1.msra.mxu0 %v435
  %625 = vmatprep.subr.mxu0 %v442
  %626 = vmatpush1.msra.mxu0 %v441
  %627 = vmatprep.subr.mxu0 %v448
  %628 = vmatpush1.msra.mxu0 %v447
  %629 = vmatprep.subr.mxu0 %v454
  %630 = vmatpush1.msra.mxu0 %v453
  %631 = vmatprep.subr.mxu0 %v460
  %632 = vmatpush1.msra.mxu0 %v459
  %633 = vmatprep.subr.mxu0 %v466
  %634 = vmatpush1.msra.mxu0 %v465
  %635 = vmatprep.subr.mxu0 %v472
  %636 = vmatpush1.msra.mxu0 %v471
  %637 = vmatprep.subr.mxu0 0.0
  %638 = vmatpush1.msra.mxu0 0.0
  %639 = vmatprep.subr.mxu0 0.0
  %640 = vmatpush1.msra.mxu0 0.0
  %641 = vmatprep.subr.mxu0 0.0
  %642 = vmatpush1.msra.mxu0 0.0
  %643 = vmatprep.subr.mxu0 0.0
  %644 = vmatpush1.msra.mxu0 0.0
  %645 = vmatprep.subr.mxu0 0.0
  %646 = vmatpush1.msra.mxu0 0.0
  %647 = vmatprep.subr.mxu0 0.0
  %648 = vmatpush1.msra.mxu0 0.0
  %649 = vmatprep.subr.mxu0 0.0
  %650 = vmatpush1.msra.mxu0 0.0
  %651 = vmatprep.subr.mxu0 0.0
  %652 = vmatpush1.msra.mxu0 0.0
  %653 = vmatprep.subr.mxu0 0.0
  %654 = vmatpush1.msra.mxu0 0.0
  %655 = vmatprep.subr.mxu0 0.0
  %656 = vmatpush1.msra.mxu0 0.0
  %657 = vmatprep.subr.mxu0 0.0
  %658 = vmatpush1.msra.mxu0 0.0
  %659 = vmatprep.subr.mxu0 0.0
  %660 = vmatpush1.msra.mxu0 0.0
  %661 = vmatprep.subr.mxu0 0.0
  %662 = vmatpush1.msra.mxu0 0.0
  %663 = vmatprep.subr.mxu0 0.0
  %664 = vmatpush1.msra.mxu0 0.0
  %665 = vmatprep.subr.mxu0 0.0
  %666 = vmatpush1.msra.mxu0 0.0
  %667 = vmatprep.subr.mxu0 0.0
  %668 = vmatpush1.msra.mxu0 0.0
  %669 = vmatprep.subr.mxu0 0.0
  %670 = vmatpush1.msra.mxu0 0.0
  %671 = vmatprep.subr.mxu0 0.0
  %672 = vmatpush1.msra.mxu0 0.0
  %673 = vmatprep.subr.mxu0 0.0
  %674 = vmatpush1.msra.mxu0 0.0
  %675 = vmatprep.subr.mxu0 0.0
  %676 = vmatpush1.msra.mxu0 0.0
  %677 = vmatprep.subr.mxu0 0.0
  %678 = vmatpush1.msra.mxu0 0.0
  %679 = vmatprep.subr.mxu0 0.0
  %680 = vmatpush1.msra.mxu0 0.0
  %681 = vmatprep.subr.mxu0 0.0
  %682 = vmatpush1.msra.mxu0 0.0
  %683 = vmatprep.mubr.f32.mxu0 0.0
  %684 = vmatmul.mubr.f32.gmra.mrb[0].mxu0 %v475
  %v685 = vpop.f32.mrb[0].mxu0
  %v686 = vadd.f32 0.0, %v685
  %v687 = vpop.f32.mrb[0].mxu0
  %v688 = vadd.f32 0.0, %v687
  %689 = vdwg.mxu0
  %v691 = vlaneseq
  %v692 = vshrl.u32 %v691, 7
  %v693 = vsub.s32 0, %v692
  %v694 = vrot.slane %v29, %v693
  %v695 = vlaneseq
  %v696 = vshrl.u32 %v695, 7
  %v697 = vsub.s32 1, %v696
  %v698 = vrot.slane %v29, %v697
  %v699 = vlaneseq
  %v700 = vshrl.u32 %v699, 7
  %v701 = vsub.s32 2, %v700
  %v702 = vrot.slane %v29, %v701
  %v703 = vlaneseq
  %v704 = vshrl.u32 %v703, 7
  %v705 = vsub.s32 3, %v704
  %v706 = vrot.slane %v29, %v705
  %v707 = vlaneseq
  %v708 = vshrl.u32 %v707, 7
  %v709 = vsub.s32 4, %v708
  %v710 = vrot.slane %v29, %v709
  %v711 = vlaneseq
  %v712 = vshrl.u32 %v711, 7
  %v713 = vsub.s32 5, %v712
  %v714 = vrot.slane %v29, %v713
  %v721 = vmul.f32 %v544, %v694
  %v722 = vmul.f32 %v546, %v698
  %v723 = vmul.f32 %v615, %v702
  %v724 = vmul.f32 %v617, %v706
  %v725 = vmul.f32 %v686, %v710
  %v726 = vmul.f32 %v688, %v714
  %v727 = vadd.f32 %v721, %v722
  %v728 = vadd.f32 %v727, %v723
  %v729 = vadd.f32 %v728, %v724
  %v730 = vadd.f32 %v729, %v725
  %v731 = vadd.f32 %v730, %v726
  %732 = vadd.xlane.f32.xlu0 %v731
  %v733 = vpop.xlane.xlu0 %732
  %v734 = vmul.f32 %v721, %v721
  %v735 = vmul.f32 %v722, %v722
  %v736 = vmul.f32 %v723, %v723
  %v737 = vmul.f32 %v724, %v724
  %v738 = vmul.f32 %v725, %v725
  %v739 = vmul.f32 %v726, %v726
  %v740 = vadd.f32 %v734, %v735
  %v741 = vadd.f32 %v740, %v736
  %v742 = vadd.f32 %v741, %v737
  %v743 = vadd.f32 %v742, %v738
  %v744 = vadd.f32 %v743, %v739
  %745 = vadd.xlane.f32.xlu0 %v744
  %v746 = vpop.xlane.xlu0 %745
  %v747 = vmul.f32 %v733, 0.001953125
  %v748 = vmul.f32 %v746, 0.001953125
  %v749 = vmul.f32 %v747, %v747
  %v750 = vsub.f32 %v748, %v749
  %v751 = vld [vmem:[%s3] sm:$0xff]
  %v752 = vadd.f32 %v750, 1e-05
  %v753 = vrsqrt.pop %v752
  %v754 = vmul.f32 %v751, %v753
  %v755 = vsub.f32 %v544, %v747
  %v756 = vsub.f32 %v546, %v747
  %v757 = vsub.f32 %v615, %v747
  %v758 = vsub.f32 %v617, %v747
  %v759 = vsub.f32 %v686, %v747
  %v760 = vsub.f32 %v688, %v747
  %762 = vset.pattern.permute.xlu0 0
  %763 = vperm.xlu0 %762, %v754
  %v764 = vpop.permute.xlu0 %763
  %v766 = vmul.f32 %v755, %v764
  %v767 = vmul.f32 %v756, %v764
  %v768 = vmul.f32 %v757, %v764
  %v769 = vmul.f32 %v758, %v764
  %v770 = vmul.f32 %v759, %v764
  %v771 = vmul.f32 %v760, %v764
  %v772 = vld [vmem:[%s4] sm:$0xff]
  %774 = vset.pattern.permute.xlu0 0
  %775 = vperm.xlu0 %774, %v772
  %v776 = vpop.permute.xlu0 %775
  %v778 = vadd.f32 %v766, %v776
  %v779 = vadd.f32 %v767, %v776
  %v780 = vadd.f32 %v768, %v776
  %v781 = vadd.f32 %v769, %v776
  %v782 = vadd.f32 %v770, %v776
  %v783 = vadd.f32 %v771, %v776
  %v784 = vmax.f32 %v778, 0.0
  %v785 = vmax.f32 %v779, 0.0
  %v786 = vmax.f32 %v780, 0.0
  %v787 = vmax.f32 %v781, 0.0
  %v788 = vmax.f32 %v782, 0.0
  %v789 = vmax.f32 %v783, 0.0
  %v790 = vmul.f32 %v784, %v694
  %v791 = vmul.f32 %v785, %v698
  %v792 = vmul.f32 %v786, %v702
  %v793 = vmul.f32 %v787, %v706
  %v794 = vmul.f32 %v788, %v710
  %v795 = vmul.f32 %v789, %v714
  %796 = vst [vmem:[#allocation3] sm:$0xff] 0.0
  %797 = vst [vmem:[#allocation3 + $0x38] sm:$0xff] 0.0
  %798 = vst [vmem:[#allocation3 + $0x8] sm:$0xff] %v790
  %799 = vst [vmem:[#allocation3 + $0x10] sm:$0xff] %v791
  %800 = vst [vmem:[#allocation3 + $0x18] sm:$0xff] %v792
  %801 = vst [vmem:[#allocation3 + $0x20] sm:$0xff] %v793
  %802 = vst [vmem:[#allocation3 + $0x28] sm:$0xff] %v794
  %803 = vst [vmem:[#allocation3 + $0x30] sm:$0xff] %v795
  %v804 = vld [vmem:[#allocation3] sm:$0xff]
  %v805 = vld [vmem:[#allocation3 + $0x8] sm:$0xff]
  %v806 = vld [vmem:[#allocation3 + $0x10] sm:$0xff]
  %v807 = vld [vmem:[#allocation3 + $0x18] sm:$0xff]
  %v808 = vld [vmem:[#allocation3 + $0x20] sm:$0xff]
  %v809 = vld [vmem:[#allocation3 + $0x28] sm:$0xff]
  %v810 = vld [vmem:[#allocation3 + $0x30] sm:$0xff]
  %818 = vrot.lane.b32.xlu0 %v804, 19
  %v819 = vpop.permute.xlu0 %818
  %820 = vrot.lane.b32.xlu0 %v805, 19
  %v821 = vpop.permute.xlu0 %820
  %822 = vrot.lane.b32.xlu0 %v806, 19
  %v823 = vpop.permute.xlu0 %822
  %824 = vrot.lane.b32.xlu0 %v807, 19
  %v825 = vpop.permute.xlu0 %824
  %826 = vrot.lane.b32.xlu0 %v808, 19
  %v827 = vpop.permute.xlu0 %826
  %828 = vrot.lane.b32.xlu0 %v809, 19
  %v829 = vpop.permute.xlu0 %828
  %830 = vrot.lane.b32.xlu0 %v810, 19
  %v831 = vpop.permute.xlu0 %830
  %v832 = vsel %vm58, %v819, %v821
  %v833 = vsel %vm58, %v821, %v823
  %v834 = vsel %vm58, %v823, %v825
  %v835 = vsel %vm58, %v825, %v827
  %v836 = vsel %vm58, %v827, %v829
  %v837 = vsel %vm58, %v829, %v831
  %844 = vst [vmem:[#allocation2] sm:$0xff] %v832
  %845 = vst [vmem:[#allocation2 + $0x8] sm:$0xff] %v833
  %846 = vst [vmem:[#allocation2 + $0x10] sm:$0xff] %v834
  %847 = vst [vmem:[#allocation2 + $0x18] sm:$0xff] %v835
  %848 = vst [vmem:[#allocation2 + $0x20] sm:$0xff] %v836
  %849 = vst [vmem:[#allocation2 + $0x28] sm:$0xff] %v837
  %v850 = vld [vmem:[#allocation3] sm:$0xff]
  %v851 = vld [vmem:[#allocation3 + $0x8] sm:$0xff]
  %v852 = vld [vmem:[#allocation3 + $0x10] sm:$0xff]
  %v853 = vld [vmem:[#allocation3 + $0x18] sm:$0xff]
  %v854 = vld [vmem:[#allocation3 + $0x20] sm:$0xff]
  %v855 = vld [vmem:[#allocation3 + $0x28] sm:$0xff]
  %v856 = vld [vmem:[#allocation3 + $0x30] sm:$0xff]
  %864 = vrot.lane.b32.xlu0 %v850, 18
  %v865 = vpop.permute.xlu0 %864
  %866 = vrot.lane.b32.xlu0 %v851, 18
  %v867 = vpop.permute.xlu0 %866
  %868 = vrot.lane.b32.xlu0 %v852, 18
  %v869 = vpop.permute.xlu0 %868
  %870 = vrot.lane.b32.xlu0 %v853, 18
  %v871 = vpop.permute.xlu0 %870
  %872 = vrot.lane.b32.xlu0 %v854, 18
  %v873 = vpop.permute.xlu0 %872
  %874 = vrot.lane.b32.xlu0 %v855, 18
  %v875 = vpop.permute.xlu0 %874
  %876 = vrot.lane.b32.xlu0 %v856, 18
  %v877 = vpop.permute.xlu0 %876
  %v878 = vsel %vm105, %v865, %v867
  %v879 = vsel %vm105, %v867, %v869
  %v880 = vsel %vm105, %v869, %v871
  %v881 = vsel %vm105, %v871, %v873
  %v882 = vsel %vm105, %v873, %v875
  %v883 = vsel %vm105, %v875, %v877
  %890 = vst [vmem:[#allocation2 + $0x30] sm:$0xff] %v878
  %891 = vst [vmem:[#allocation2 + $0x38] sm:$0xff] %v879
  %892 = vst [vmem:[#allocation2 + $0x40] sm:$0xff] %v880
  %893 = vst [vmem:[#allocation2 + $0x48] sm:$0xff] %v881
  %894 = vst [vmem:[#allocation2 + $0x50] sm:$0xff] %v882
  %895 = vst [vmem:[#allocation2 + $0x58] sm:$0xff] %v883
  %v896 = vld [vmem:[#allocation3] sm:$0xff]
  %v897 = vld [vmem:[#allocation3 + $0x8] sm:$0xff]
  %v898 = vld [vmem:[#allocation3 + $0x10] sm:$0xff]
  %v899 = vld [vmem:[#allocation3 + $0x18] sm:$0xff]
  %v900 = vld [vmem:[#allocation3 + $0x20] sm:$0xff]
  %v901 = vld [vmem:[#allocation3 + $0x28] sm:$0xff]
  %v902 = vld [vmem:[#allocation3 + $0x30] sm:$0xff]
  %910 = vrot.lane.b32.xlu0 %v896, 17
  %v911 = vpop.permute.xlu0 %910
  %912 = vrot.lane.b32.xlu0 %v897, 17
  %v913 = vpop.permute.xlu0 %912
  %914 = vrot.lane.b32.xlu0 %v898, 17
  %v915 = vpop.permute.xlu0 %914
  %916 = vrot.lane.b32.xlu0 %v899, 17
  %v917 = vpop.permute.xlu0 %916
  %918 = vrot.lane.b32.xlu0 %v900, 17
  %v919 = vpop.permute.xlu0 %918
  %920 = vrot.lane.b32.xlu0 %v901, 17
  %v921 = vpop.permute.xlu0 %920
  %922 = vrot.lane.b32.xlu0 %v902, 17
  %v923 = vpop.permute.xlu0 %922
  %v924 = vsel %vm152, %v911, %v913
  %v925 = vsel %vm152, %v913, %v915
  %v926 = vsel %vm152, %v915, %v917
  %v927 = vsel %vm152, %v917, %v919
  %v928 = vsel %vm152, %v919, %v921
  %v929 = vsel %vm152, %v921, %v923
  %936 = vst [vmem:[#allocation2 + $0x60] sm:$0xff] %v924
  %937 = vst [vmem:[#allocation2 + $0x68] sm:$0xff] %v925
  %938 = vst [vmem:[#allocation2 + $0x70] sm:$0xff] %v926
  %939 = vst [vmem:[#allocation2 + $0x78] sm:$0xff] %v927
  %940 = vst [vmem:[#allocation2 + $0x80] sm:$0xff] %v928
  %941 = vst [vmem:[#allocation2 + $0x88] sm:$0xff] %v929
  %v942 = vld [vmem:[#allocation3] sm:$0xff]
  %v943 = vld [vmem:[#allocation3 + $0x8] sm:$0xff]
  %v944 = vld [vmem:[#allocation3 + $0x10] sm:$0xff]
  %v945 = vld [vmem:[#allocation3 + $0x18] sm:$0xff]
  %v946 = vld [vmem:[#allocation3 + $0x20] sm:$0xff]
  %v947 = vld [vmem:[#allocation3 + $0x28] sm:$0xff]
  %v948 = vld [vmem:[#allocation3 + $0x30] sm:$0xff]
  %956 = vrot.lane.b32.xlu0 %v942, 1
  %v957 = vpop.permute.xlu0 %956
  %958 = vrot.lane.b32.xlu0 %v943, 1
  %v959 = vpop.permute.xlu0 %958
  %960 = vrot.lane.b32.xlu0 %v944, 1
  %v961 = vpop.permute.xlu0 %960
  %962 = vrot.lane.b32.xlu0 %v945, 1
  %v963 = vpop.permute.xlu0 %962
  %964 = vrot.lane.b32.xlu0 %v946, 1
  %v965 = vpop.permute.xlu0 %964
  %966 = vrot.lane.b32.xlu0 %v947, 1
  %v967 = vpop.permute.xlu0 %966
  %968 = vrot.lane.b32.xlu0 %v948, 1
  %v969 = vpop.permute.xlu0 %968
  %v970 = vsel %vm199, %v957, %v959
  %v971 = vsel %vm199, %v959, %v961
  %v972 = vsel %vm199, %v961, %v963
  %v973 = vsel %vm199, %v963, %v965
  %v974 = vsel %vm199, %v965, %v967
  %v975 = vsel %vm199, %v967, %v969
  %982 = vst [vmem:[#allocation2 + $0x90] sm:$0xff] %v970
  %983 = vst [vmem:[#allocation2 + $0x98] sm:$0xff] %v971
  %984 = vst [vmem:[#allocation2 + $0xa0] sm:$0xff] %v972
  %985 = vst [vmem:[#allocation2 + $0xa8] sm:$0xff] %v973
  %986 = vst [vmem:[#allocation2 + $0xb0] sm:$0xff] %v974
  %987 = vst [vmem:[#allocation2 + $0xb8] sm:$0xff] %v975
  %v988 = vld [vmem:[#allocation3 + $0x8] sm:$0xff]
  %v989 = vld [vmem:[#allocation3 + $0x10] sm:$0xff]
  %v990 = vld [vmem:[#allocation3 + $0x18] sm:$0xff]
  %v991 = vld [vmem:[#allocation3 + $0x20] sm:$0xff]
  %v992 = vld [vmem:[#allocation3 + $0x28] sm:$0xff]
  %v993 = vld [vmem:[#allocation3 + $0x30] sm:$0xff]
  %994 = vst [vmem:[#allocation2 + $0xc0] sm:$0xff] %v988
  %995 = vst [vmem:[#allocation2 + $0xc8] sm:$0xff] %v989
  %996 = vst [vmem:[#allocation2 + $0xd0] sm:$0xff] %v990
  %997 = vst [vmem:[#allocation2 + $0xd8] sm:$0xff] %v991
  %998 = vst [vmem:[#allocation2 + $0xe0] sm:$0xff] %v992
  %999 = vst [vmem:[#allocation2 + $0xe8] sm:$0xff] %v993
  %v1000 = vld [vmem:[#allocation3 + $0x8] sm:$0xff]
  %v1001 = vld [vmem:[#allocation3 + $0x10] sm:$0xff]
  %v1002 = vld [vmem:[#allocation3 + $0x18] sm:$0xff]
  %v1003 = vld [vmem:[#allocation3 + $0x20] sm:$0xff]
  %v1004 = vld [vmem:[#allocation3 + $0x28] sm:$0xff]
  %v1005 = vld [vmem:[#allocation3 + $0x30] sm:$0xff]
  %v1006 = vld [vmem:[#allocation3 + $0x38] sm:$0xff]
  %1014 = vrot.lane.b32.xlu0 %v1000, 127
  %v1015 = vpop.permute.xlu0 %1014
  %1016 = vrot.lane.b32.xlu0 %v1001, 127
  %v1017 = vpop.permute.xlu0 %1016
  %1018 = vrot.lane.b32.xlu0 %v1002, 127
  %v1019 = vpop.permute.xlu0 %1018
  %1020 = vrot.lane.b32.xlu0 %v1003, 127
  %v1021 = vpop.permute.xlu0 %1020
  %1022 = vrot.lane.b32.xlu0 %v1004, 127
  %v1023 = vpop.permute.xlu0 %1022
  %1024 = vrot.lane.b32.xlu0 %v1005, 127
  %v1025 = vpop.permute.xlu0 %1024
  %1026 = vrot.lane.b32.xlu0 %v1006, 127
  %v1027 = vpop.permute.xlu0 %1026
  %v1028 = vsel %vm258, %v1015, %v1017
  %v1029 = vsel %vm258, %v1017, %v1019
  %v1030 = vsel %vm258, %v1019, %v1021
  %v1031 = vsel %vm258, %v1021, %v1023
  %v1032 = vsel %vm258, %v1023, %v1025
  %v1033 = vsel %vm258, %v1025, %v1027
  %1040 = vst [vmem:[#allocation2 + $0xf0] sm:$0xff] %v1028
  %1041 = vst [vmem:[#allocation2 + $0xf8] sm:$0xff] %v1029
  %1042 = vst [vmem:[#allocation2 + $0x100] sm:$0xff] %v1030
  %1043 = vst [vmem:[#allocation2 + $0x108] sm:$0xff] %v1031
  %1044 = vst [vmem:[#allocation2 + $0x110] sm:$0xff] %v1032
  %1045 = vst [vmem:[#allocation2 + $0x118] sm:$0xff] %v1033
  %v1046 = vld [vmem:[#allocation3 + $0x8] sm:$0xff]
  %v1047 = vld [vmem:[#allocation3 + $0x10] sm:$0xff]
  %v1048 = vld [vmem:[#allocation3 + $0x18] sm:$0xff]
  %v1049 = vld [vmem:[#allocation3 + $0x20] sm:$0xff]
  %v1050 = vld [vmem:[#allocation3 + $0x28] sm:$0xff]
  %v1051 = vld [vmem:[#allocation3 + $0x30] sm:$0xff]
  %v1052 = vld [vmem:[#allocation3 + $0x38] sm:$0xff]
  %1060 = vrot.lane.b32.xlu0 %v1046, 111
  %v1061 = vpop.permute.xlu0 %1060
  %1062 = vrot.lane.b32.xlu0 %v1047, 111
  %v1063 = vpop.permute.xlu0 %1062
  %1064 = vrot.lane.b32.xlu0 %v1048, 111
  %v1065 = vpop.permute.xlu0 %1064
  %1066 = vrot.lane.b32.xlu0 %v1049, 111
  %v1067 = vpop.permute.xlu0 %1066
  %1068 = vrot.lane.b32.xlu0 %v1050, 111
  %v1069 = vpop.permute.xlu0 %1068
  %1070 = vrot.lane.b32.xlu0 %v1051, 111
  %v1071 = vpop.permute.xlu0 %1070
  %1072 = vrot.lane.b32.xlu0 %v1052, 111
  %v1073 = vpop.permute.xlu0 %1072
  %v1074 = vsel %vm305, %v1061, %v1063
  %v1075 = vsel %vm305, %v1063, %v1065
  %v1076 = vsel %vm305, %v1065, %v1067
  %v1077 = vsel %vm305, %v1067, %v1069
  %v1078 = vsel %vm305, %v1069, %v1071
  %v1079 = vsel %vm305, %v1071, %v1073
  %1086 = vst [vmem:[#allocation2 + $0x120] sm:$0xff] %v1074
  %1087 = vst [vmem:[#allocation2 + $0x128] sm:$0xff] %v1075
  %1088 = vst [vmem:[#allocation2 + $0x130] sm:$0xff] %v1076
  %1089 = vst [vmem:[#allocation2 + $0x138] sm:$0xff] %v1077
  %1090 = vst [vmem:[#allocation2 + $0x140] sm:$0xff] %v1078
  %1091 = vst [vmem:[#allocation2 + $0x148] sm:$0xff] %v1079
  %v1092 = vld [vmem:[#allocation3 + $0x8] sm:$0xff]
  %v1093 = vld [vmem:[#allocation3 + $0x10] sm:$0xff]
  %v1094 = vld [vmem:[#allocation3 + $0x18] sm:$0xff]
  %v1095 = vld [vmem:[#allocation3 + $0x20] sm:$0xff]
  %v1096 = vld [vmem:[#allocation3 + $0x28] sm:$0xff]
  %v1097 = vld [vmem:[#allocation3 + $0x30] sm:$0xff]
  %v1098 = vld [vmem:[#allocation3 + $0x38] sm:$0xff]
  %1106 = vrot.lane.b32.xlu0 %v1092, 110
  %v1107 = vpop.permute.xlu0 %1106
  %1108 = vrot.lane.b32.xlu0 %v1093, 110
  %v1109 = vpop.permute.xlu0 %1108
  %1110 = vrot.lane.b32.xlu0 %v1094, 110
  %v1111 = vpop.permute.xlu0 %1110
  %1112 = vrot.lane.b32.xlu0 %v1095, 110
  %v1113 = vpop.permute.xlu0 %1112
  %1114 = vrot.lane.b32.xlu0 %v1096, 110
  %v1115 = vpop.permute.xlu0 %1114
  %1116 = vrot.lane.b32.xlu0 %v1097, 110
  %v1117 = vpop.permute.xlu0 %1116
  %1118 = vrot.lane.b32.xlu0 %v1098, 110
  %v1119 = vpop.permute.xlu0 %1118
  %v1120 = vsel %vm352, %v1107, %v1109
  %v1121 = vsel %vm352, %v1109, %v1111
  %v1122 = vsel %vm352, %v1111, %v1113
  %v1123 = vsel %vm352, %v1113, %v1115
  %v1124 = vsel %vm352, %v1115, %v1117
  %v1125 = vsel %vm352, %v1117, %v1119
  %1132 = vst [vmem:[#allocation2 + $0x150] sm:$0xff] %v1120
  %1133 = vst [vmem:[#allocation2 + $0x158] sm:$0xff] %v1121
  %1134 = vst [vmem:[#allocation2 + $0x160] sm:$0xff] %v1122
  %1135 = vst [vmem:[#allocation2 + $0x168] sm:$0xff] %v1123
  %1136 = vst [vmem:[#allocation2 + $0x170] sm:$0xff] %v1124
  %1137 = vst [vmem:[#allocation2 + $0x178] sm:$0xff] %v1125
  %v1138 = vld [vmem:[#allocation3 + $0x8] sm:$0xff]
  %v1139 = vld [vmem:[#allocation3 + $0x10] sm:$0xff]
  %v1140 = vld [vmem:[#allocation3 + $0x18] sm:$0xff]
  %v1141 = vld [vmem:[#allocation3 + $0x20] sm:$0xff]
  %v1142 = vld [vmem:[#allocation3 + $0x28] sm:$0xff]
  %v1143 = vld [vmem:[#allocation3 + $0x30] sm:$0xff]
  %v1144 = vld [vmem:[#allocation3 + $0x38] sm:$0xff]
  %1152 = vrot.lane.b32.xlu0 %v1138, 109
  %v1153 = vpop.permute.xlu0 %1152
  %1154 = vrot.lane.b32.xlu0 %v1139, 109
  %v1155 = vpop.permute.xlu0 %1154
  %1156 = vrot.lane.b32.xlu0 %v1140, 109
  %v1157 = vpop.permute.xlu0 %1156
  %1158 = vrot.lane.b32.xlu0 %v1141, 109
  %v1159 = vpop.permute.xlu0 %1158
  %1160 = vrot.lane.b32.xlu0 %v1142, 109
  %v1161 = vpop.permute.xlu0 %1160
  %1162 = vrot.lane.b32.xlu0 %v1143, 109
  %v1163 = vpop.permute.xlu0 %1162
  %1164 = vrot.lane.b32.xlu0 %v1144, 109
  %v1165 = vpop.permute.xlu0 %1164
  %v1166 = vsel %vm399, %v1153, %v1155
  %v1167 = vsel %vm399, %v1155, %v1157
  %v1168 = vsel %vm399, %v1157, %v1159
  %v1169 = vsel %vm399, %v1159, %v1161
  %v1170 = vsel %vm399, %v1161, %v1163
  %v1171 = vsel %vm399, %v1163, %v1165
  %1178 = vst [vmem:[#allocation2 + $0x180] sm:$0xff] %v1166
  %1179 = vst [vmem:[#allocation2 + $0x188] sm:$0xff] %v1167
  %1180 = vst [vmem:[#allocation2 + $0x190] sm:$0xff] %v1168
  %1181 = vst [vmem:[#allocation2 + $0x198] sm:$0xff] %v1169
  %1182 = vst [vmem:[#allocation2 + $0x1a0] sm:$0xff] %v1170
  %1183 = vst [vmem:[#allocation2 + $0x1a8] sm:$0xff] %v1171
  %v1184 = vld [vmem:[%s5] sm:$0xff]
  %v1185 = vld [vmem:[#allocation2] sm:$0xff]
  %v1186 = vld [vmem:[#allocation2 + $0x8] sm:$0xff]
  %v1187 = vld [vmem:[#allocation2 + $0x10] sm:$0xff]
  %v1188 = vld [vmem:[#allocation2 + $0x18] sm:$0xff]
  %v1189 = vld [vmem:[#allocation2 + $0x20] sm:$0xff]
  %v1190 = vld [vmem:[#allocation2 + $0x28] sm:$0xff]
  %v1191 = vld [vmem:[#allocation2 + $0x30] sm:$0xff]
  %v1192 = vld [vmem:[#allocation2 + $0x38] sm:$0xff]
  %v1193 = vld [vmem:[#allocation2 + $0x40] sm:$0xff]
  %v1194 = vld [vmem:[#allocation2 + $0x48] sm:$0xff]
  %v1195 = vld [vmem:[#allocation2 + $0x50] sm:$0xff]
  %v1196 = vld [vmem:[#allocation2 + $0x58] sm:$0xff]
  %v1197 = vld [vmem:[#allocation2 + $0x60] sm:$0xff]
  %v1198 = vld [vmem:[#allocation2 + $0x68] sm:$0xff]
  %v1199 = vld [vmem:[#allocation2 + $0x70] sm:$0xff]
  %v1200 = vld [vmem:[#allocation2 + $0x78] sm:$0xff]
  %v1201 = vld [vmem:[#allocation2 + $0x80] sm:$0xff]
  %v1202 = vld [vmem:[#allocation2 + $0x88] sm:$0xff]
  %v1203 = vld [vmem:[#allocation2 + $0x90] sm:$0xff]
  %v1204 = vld [vmem:[#allocation2 + $0x98] sm:$0xff]
  %v1205 = vld [vmem:[#allocation2 + $0xa0] sm:$0xff]
  %v1206 = vld [vmem:[#allocation2 + $0xa8] sm:$0xff]
  %v1207 = vld [vmem:[#allocation2 + $0xb0] sm:$0xff]
  %v1208 = vld [vmem:[#allocation2 + $0xb8] sm:$0xff]
  %v1209 = vld [vmem:[#allocation2 + $0xc0] sm:$0xff]
  %v1210 = vld [vmem:[#allocation2 + $0xc8] sm:$0xff]
  %v1211 = vld [vmem:[#allocation2 + $0xd0] sm:$0xff]
  %v1212 = vld [vmem:[#allocation2 + $0xd8] sm:$0xff]
  %v1213 = vld [vmem:[#allocation2 + $0xe0] sm:$0xff]
  %v1214 = vld [vmem:[#allocation2 + $0xe8] sm:$0xff]
  %v1215 = vld [vmem:[#allocation2 + $0xf0] sm:$0xff]
  %v1216 = vld [vmem:[#allocation2 + $0xf8] sm:$0xff]
  %v1217 = vld [vmem:[#allocation2 + $0x100] sm:$0xff]
  %v1218 = vld [vmem:[#allocation2 + $0x108] sm:$0xff]
  %v1219 = vld [vmem:[#allocation2 + $0x110] sm:$0xff]
  %v1220 = vld [vmem:[#allocation2 + $0x118] sm:$0xff]
  %v1221 = vld [vmem:[#allocation2 + $0x120] sm:$0xff]
  %v1222 = vld [vmem:[#allocation2 + $0x128] sm:$0xff]
  %v1223 = vld [vmem:[#allocation2 + $0x130] sm:$0xff]
  %v1224 = vld [vmem:[#allocation2 + $0x138] sm:$0xff]
  %v1225 = vld [vmem:[#allocation2 + $0x140] sm:$0xff]
  %v1226 = vld [vmem:[#allocation2 + $0x148] sm:$0xff]
  %v1227 = vld [vmem:[#allocation2 + $0x150] sm:$0xff]
  %v1228 = vld [vmem:[#allocation2 + $0x158] sm:$0xff]
  %v1229 = vld [vmem:[#allocation2 + $0x160] sm:$0xff]
  %v1230 = vld [vmem:[#allocation2 + $0x168] sm:$0xff]
  %v1231 = vld [vmem:[#allocation2 + $0x170] sm:$0xff]
  %v1232 = vld [vmem:[#allocation2 + $0x178] sm:$0xff]
  %v1233 = vld [vmem:[#allocation2 + $0x180] sm:$0xff]
  %v1234 = vld [vmem:[#allocation2 + $0x188] sm:$0xff]
  %v1235 = vld [vmem:[#allocation2 + $0x190] sm:$0xff]
  %v1236 = vld [vmem:[#allocation2 + $0x198] sm:$0xff]
  %v1237 = vld [vmem:[#allocation2 + $0x1a0] sm:$0xff]
  %v1238 = vld [vmem:[#allocation2 + $0x1a8] sm:$0xff]
  %v1240 = vsel %vm473, %v1184, 0
  %1242 = vmatprep.subr.mxu0 %v1186
  %1243 = vmatpush1.msra.mxu0 %v1185
  %1244 = vmatprep.subr.mxu0 %v1192
  %1245 = vmatpush1.msra.mxu0 %v1191
  %1246 = vmatprep.subr.mxu0 %v1198
  %1247 = vmatpush1.msra.mxu0 %v1197
  %1248 = vmatprep.subr.mxu0 %v1204
  %1249 = vmatpush1.msra.mxu0 %v1203
  %1250 = vmatprep.subr.mxu0 %v1210
  %1251 = vmatpush1.msra.mxu0 %v1209
  %1252 = vmatprep.subr.mxu0 %v1216
  %1253 = vmatpush1.msra.mxu0 %v1215
  %1254 = vmatprep.subr.mxu0 %v1222
  %1255 = vmatpush1.msra.mxu0 %v1221
  %1256 = vmatprep.subr.mxu0 %v1228
  %1257 = vmatpush1.msra.mxu0 %v1227
  %1258 = vmatprep.subr.mxu0 %v1234
  %1259 = vmatpush1.msra.mxu0 %v1233
  %1260 = vmatprep.subr.mxu0 0.0
  %1261 = vmatpush1.msra.mxu0 0.0
  %1262 = vmatprep.subr.mxu0 0.0
  %1263 = vmatpush1.msra.mxu0 0.0
  %1264 = vmatprep.subr.mxu0 0.0
  %1265 = vmatpush1.msra.mxu0 0.0
  %1266 = vmatprep.subr.mxu0 0.0
  %1267 = vmatpush1.msra.mxu0 0.0
  %1268 = vmatprep.subr.mxu0 0.0
  %1269 = vmatpush1.msra.mxu0 0.0
  %1270 = vmatprep.subr.mxu0 0.0
  %1271 = vmatpush1.msra.mxu0 0.0
  %1272 = vmatprep.subr.mxu0 0.0
  %1273 = vmatpush1.msra.mxu0 0.0
  %1274 = vmatprep.subr.mxu0 0.0
  %1275 = vmatpush1.msra.mxu0 0.0
  %1276 = vmatprep.subr.mxu0 0.0
  %1277 = vmatpush1.msra.mxu0 0.0
  %1278 = vmatprep.subr.mxu0 0.0
  %1279 = vmatpush1.msra.mxu0 0.0
  %1280 = vmatprep.subr.mxu0 0.0
  %1281 = vmatpush1.msra.mxu0 0.0
  %1282 = vmatprep.subr.mxu0 0.0
  %1283 = vmatpush1.msra.mxu0 0.0
  %1284 = vmatprep.subr.mxu0 0.0
  %1285 = vmatpush1.msra.mxu0 0.0
  %1286 = vmatprep.subr.mxu0 0.0
  %1287 = vmatpush1.msra.mxu0 0.0
  %1288 = vmatprep.subr.mxu0 0.0
  %1289 = vmatpush1.msra.mxu0 0.0
  %1290 = vmatprep.subr.mxu0 0.0
  %1291 = vmatpush1.msra.mxu0 0.0
  %1292 = vmatprep.subr.mxu0 0.0
  %1293 = vmatpush1.msra.mxu0 0.0
  %1294 = vmatprep.subr.mxu0 0.0
  %1295 = vmatpush1.msra.mxu0 0.0
  %1296 = vmatprep.subr.mxu0 0.0
  %1297 = vmatpush1.msra.mxu0 0.0
  %1298 = vmatprep.subr.mxu0 0.0
  %1299 = vmatpush1.msra.mxu0 0.0
  %1300 = vmatprep.subr.mxu0 0.0
  %1301 = vmatpush1.msra.mxu0 0.0
  %1302 = vmatprep.subr.mxu0 0.0
  %1303 = vmatpush1.msra.mxu0 0.0
  %1304 = vmatprep.subr.mxu0 0.0
  %1305 = vmatpush1.msra.mxu0 0.0
  %1306 = vmatprep.mubr.f32.mxu0 0.0
  %1307 = vmatmul.mubr.f32.gmra.mrb[0].mxu0 %v1240
  %v1308 = vpop.f32.mrb[0].mxu0
  %v1309 = vadd.f32 0.0, %v1308
  %v1310 = vpop.f32.mrb[0].mxu0
  %v1311 = vadd.f32 0.0, %v1310
  %1312 = vdwg.mxu0
  %1313 = vmatprep.subr.mxu0 %v1188
  %1314 = vmatpush1.msra.mxu0 %v1187
  %1315 = vmatprep.subr.mxu0 %v1194
  %1316 = vmatpush1.msra.mxu0 %v1193
  %1317 = vmatprep.subr.mxu0 %v1200
  %1318 = vmatpush1.msra.mxu0 %v1199
  %1319 = vmatprep.subr.mxu0 %v1206
  %1320 = vmatpush1.msra.mxu0 %v1205
  %1321 = vmatprep.subr.mxu0 %v1212
  %1322 = vmatpush1.msra.mxu0 %v1211
  %1323 = vmatprep.subr.mxu0 %v1218
  %1324 = vmatpush1.msra.mxu0 %v1217
  %1325 = vmatprep.subr.mxu0 %v1224
  %1326 = vmatpush1.msra.mxu0 %v1223
  %1327 = vmatprep.subr.mxu0 %v1230
  %1328 = vmatpush1.msra.mxu0 %v1229
  %1329 = vmatprep.subr.mxu0 %v1236
  %1330 = vmatpush1.msra.mxu0 %v1235
  %1331 = vmatprep.subr.mxu0 0.0
  %1332 = vmatpush1.msra.mxu0 0.0
  %1333 = vmatprep.subr.mxu0 0.0
  %1334 = vmatpush1.msra.mxu0 0.0
  %1335 = vmatprep.subr.mxu0 0.0
  %1336 = vmatpush1.msra.mxu0 0.0
  %1337 = vmatprep.subr.mxu0 0.0
  %1338 = vmatpush1.msra.mxu0 0.0
  %1339 = vmatprep.subr.mxu0 0.0
  %1340 = vmatpush1.msra.mxu0 0.0
  %1341 = vmatprep.subr.mxu0 0.0
  %1342 = vmatpush1.msra.mxu0 0.0
  %1343 = vmatprep.subr.mxu0 0.0
  %1344 = vmatpush1.msra.mxu0 0.0
  %1345 = vmatprep.subr.mxu0 0.0
  %1346 = vmatpush1.msra.mxu0 0.0
  %1347 = vmatprep.subr.mxu0 0.0
  %1348 = vmatpush1.msra.mxu0 0.0
  %1349 = vmatprep.subr.mxu0 0.0
  %1350 = vmatpush1.msra.mxu0 0.0
  %1351 = vmatprep.subr.mxu0 0.0
  %1352 = vmatpush1.msra.mxu0 0.0
  %1353 = vmatprep.subr.mxu0 0.0
  %1354 = vmatpush1.msra.mxu0 0.0
  %1355 = vmatprep.subr.mxu0 0.0
  %1356 = vmatpush1.msra.mxu0 0.0
  %1357 = vmatprep.subr.mxu0 0.0
  %1358 = vmatpush1.msra.mxu0 0.0
  %1359 = vmatprep.subr.mxu0 0.0
  %1360 = vmatpush1.msra.mxu0 0.0
  %1361 = vmatprep.subr.mxu0 0.0
  %1362 = vmatpush1.msra.mxu0 0.0
  %1363 = vmatprep.subr.mxu0 0.0
  %1364 = vmatpush1.msra.mxu0 0.0
  %1365 = vmatprep.subr.mxu0 0.0
  %1366 = vmatpush1.msra.mxu0 0.0
  %1367 = vmatprep.subr.mxu0 0.0
  %1368 = vmatpush1.msra.mxu0 0.0
  %1369 = vmatprep.subr.mxu0 0.0
  %1370 = vmatpush1.msra.mxu0 0.0
  %1371 = vmatprep.subr.mxu0 0.0
  %1372 = vmatpush1.msra.mxu0 0.0
  %1373 = vmatprep.subr.mxu0 0.0
  %1374 = vmatpush1.msra.mxu0 0.0
  %1375 = vmatprep.subr.mxu0 0.0
  %1376 = vmatpush1.msra.mxu0 0.0
  %1377 = vmatprep.mubr.f32.mxu0 0.0
  %1378 = vmatmul.mubr.f32.gmra.mrb[0].mxu0 %v1240
  %v1379 = vpop.f32.mrb[0].mxu0
  %v1380 = vadd.f32 0.0, %v1379
  %v1381 = vpop.f32.mrb[0].mxu0
  %v1382 = vadd.f32 0.0, %v1381
  %1383 = vdwg.mxu0
  %1384 = vmatprep.subr.mxu0 %v1190
  %1385 = vmatpush1.msra.mxu0 %v1189
  %1386 = vmatprep.subr.mxu0 %v1196
  %1387 = vmatpush1.msra.mxu0 %v1195
  %1388 = vmatprep.subr.mxu0 %v1202
  %1389 = vmatpush1.msra.mxu0 %v1201
  %1390 = vmatprep.subr.mxu0 %v1208
  %1391 = vmatpush1.msra.mxu0 %v1207
  %1392 = vmatprep.subr.mxu0 %v1214
  %1393 = vmatpush1.msra.mxu0 %v1213
  %1394 = vmatprep.subr.mxu0 %v1220
  %1395 = vmatpush1.msra.mxu0 %v1219
  %1396 = vmatprep.subr.mxu0 %v1226
  %1397 = vmatpush1.msra.mxu0 %v1225
  %1398 = vmatprep.subr.mxu0 %v1232
  %1399 = vmatpush1.msra.mxu0 %v1231
  %1400 = vmatprep.subr.mxu0 %v1238
  %1401 = vmatpush1.msra.mxu0 %v1237
  %1402 = vmatprep.subr.mxu0 0.0
  %1403 = vmatpush1.msra.mxu0 0.0
  %1404 = vmatprep.subr.mxu0 0.0
  %1405 = vmatpush1.msra.mxu0 0.0
  %1406 = vmatprep.subr.mxu0 0.0
  %1407 = vmatpush1.msra.mxu0 0.0
  %1408 = vmatprep.subr.mxu0 0.0
  %1409 = vmatpush1.msra.mxu0 0.0
  %1410 = vmatprep.subr.mxu0 0.0
  %1411 = vmatpush1.msra.mxu0 0.0
  %1412 = vmatprep.subr.mxu0 0.0
  %1413 = vmatpush1.msra.mxu0 0.0
  %1414 = vmatprep.subr.mxu0 0.0
  %1415 = vmatpush1.msra.mxu0 0.0
  %1416 = vmatprep.subr.mxu0 0.0
  %1417 = vmatpush1.msra.mxu0 0.0
  %1418 = vmatprep.subr.mxu0 0.0
  %1419 = vmatpush1.msra.mxu0 0.0
  %1420 = vmatprep.subr.mxu0 0.0
  %1421 = vmatpush1.msra.mxu0 0.0
  %1422 = vmatprep.subr.mxu0 0.0
  %1423 = vmatpush1.msra.mxu0 0.0
  %1424 = vmatprep.subr.mxu0 0.0
  %1425 = vmatpush1.msra.mxu0 0.0
  %1426 = vmatprep.subr.mxu0 0.0
  %1427 = vmatpush1.msra.mxu0 0.0
  %1428 = vmatprep.subr.mxu0 0.0
  %1429 = vmatpush1.msra.mxu0 0.0
  %1430 = vmatprep.subr.mxu0 0.0
  %1431 = vmatpush1.msra.mxu0 0.0
  %1432 = vmatprep.subr.mxu0 0.0
  %1433 = vmatpush1.msra.mxu0 0.0
  %1434 = vmatprep.subr.mxu0 0.0
  %1435 = vmatpush1.msra.mxu0 0.0
  %1436 = vmatprep.subr.mxu0 0.0
  %1437 = vmatpush1.msra.mxu0 0.0
  %1438 = vmatprep.subr.mxu0 0.0
  %1439 = vmatpush1.msra.mxu0 0.0
  %1440 = vmatprep.subr.mxu0 0.0
  %1441 = vmatpush1.msra.mxu0 0.0
  %1442 = vmatprep.subr.mxu0 0.0
  %1443 = vmatpush1.msra.mxu0 0.0
  %1444 = vmatprep.subr.mxu0 0.0
  %1445 = vmatpush1.msra.mxu0 0.0
  %1446 = vmatprep.subr.mxu0 0.0
  %1447 = vmatpush1.msra.mxu0 0.0
  %1448 = vmatprep.mubr.f32.mxu0 0.0
  %1449 = vmatmul.mubr.f32.gmra.mrb[0].mxu0 %v1240
  %v1450 = vpop.f32.mrb[0].mxu0
  %v1451 = vadd.f32 0.0, %v1450
  %v1452 = vpop.f32.mrb[0].mxu0
  %v1453 = vadd.f32 0.0, %v1452
  %1454 = vdwg.mxu0
  %v1455 = vmul.f32 %v1309, %v694
  %v1456 = vmul.f32 %v1311, %v698
  %v1457 = vmul.f32 %v1380, %v702
  %v1458 = vmul.f32 %v1382, %v706
  %v1459 = vmul.f32 %v1451, %v710
  %v1460 = vmul.f32 %v1453, %v714
  %v1461 = vadd.f32 %v1455, %v1456
  %v1462 = vadd.f32 %v1461, %v1457
  %v1463 = vadd.f32 %v1462, %v1458
  %v1464 = vadd.f32 %v1463, %v1459
  %v1465 = vadd.f32 %v1464, %v1460
  %1466 = vadd.xlane.f32.xlu0 %v1465
  %v1467 = vpop.xlane.xlu0 %1466
  %v1468 = vmul.f32 %v1455, %v1455
  %v1469 = vmul.f32 %v1456, %v1456
  %v1470 = vmul.f32 %v1457, %v1457
  %v1471 = vmul.f32 %v1458, %v1458
  %v1472 = vmul.f32 %v1459, %v1459
  %v1473 = vmul.f32 %v1460, %v1460
  %v1474 = vadd.f32 %v1468, %v1469
  %v1475 = vadd.f32 %v1474, %v1470
  %v1476 = vadd.f32 %v1475, %v1471
  %v1477 = vadd.f32 %v1476, %v1472
  %v1478 = vadd.f32 %v1477, %v1473
  %1479 = vadd.xlane.f32.xlu0 %v1478
  %v1480 = vpop.xlane.xlu0 %1479
  %v1481 = vmul.f32 %v1467, 0.001953125
  %v1482 = vmul.f32 %v1480, 0.001953125
  %v1483 = vmul.f32 %v1481, %v1481
  %v1484 = vsub.f32 %v1482, %v1483
  %v1485 = vld [vmem:[%s6] sm:$0xff]
  %v1486 = vadd.f32 %v1484, 1e-05
  %v1487 = vrsqrt.pop %v1486
  %v1488 = vmul.f32 %v1485, %v1487
  %v1489 = vsub.f32 %v1309, %v1481
  %v1490 = vsub.f32 %v1311, %v1481
  %v1491 = vsub.f32 %v1380, %v1481
  %v1492 = vsub.f32 %v1382, %v1481
  %v1493 = vsub.f32 %v1451, %v1481
  %v1494 = vsub.f32 %v1453, %v1481
  %1496 = vset.pattern.permute.xlu0 0
  %1497 = vperm.xlu0 %1496, %v1488
  %v1498 = vpop.permute.xlu0 %1497
  %v1500 = vmul.f32 %v1489, %v1498
  %v1501 = vmul.f32 %v1490, %v1498
  %v1502 = vmul.f32 %v1491, %v1498
  %v1503 = vmul.f32 %v1492, %v1498
  %v1504 = vmul.f32 %v1493, %v1498
  %v1505 = vmul.f32 %v1494, %v1498
  %v1506 = vld [vmem:[%s7] sm:$0xff]
  %1508 = vset.pattern.permute.xlu0 0
  %1509 = vperm.xlu0 %1508, %v1506
  %v1510 = vpop.permute.xlu0 %1509
  %v1512 = vadd.f32 %v1500, %v1510
  %v1513 = vadd.f32 %v1501, %v1510
  %v1514 = vadd.f32 %v1502, %v1510
  %v1515 = vadd.f32 %v1503, %v1510
  %v1516 = vadd.f32 %v1504, %v1510
  %v1517 = vadd.f32 %v1505, %v1510
  %v1518 = vld [vmem:[%s0 + $0x8] sm:$0xff]
  %v1519 = vld [vmem:[%s0 + $0x10] sm:$0xff]
  %v1520 = vld [vmem:[%s0 + $0x18] sm:$0xff]
  %v1521 = vld [vmem:[%s0 + $0x20] sm:$0xff]
  %v1522 = vld [vmem:[%s0 + $0x28] sm:$0xff]
  %v1523 = vld [vmem:[%s0 + $0x30] sm:$0xff]
  %v1524 = vadd.f32 %v1512, %v1518
  %v1525 = vadd.f32 %v1513, %v1519
  %v1526 = vadd.f32 %v1514, %v1520
  %v1527 = vadd.f32 %v1515, %v1521
  %v1528 = vadd.f32 %v1516, %v1522
  %v1529 = vadd.f32 %v1517, %v1523
  %v1530 = vmax.f32 %v1524, 0.0
  %v1531 = vmax.f32 %v1525, 0.0
  %v1532 = vmax.f32 %v1526, 0.0
  %v1533 = vmax.f32 %v1527, 0.0
  %v1534 = vmax.f32 %v1528, 0.0
  %v1535 = vmax.f32 %v1529, 0.0
  %1536 = vst [vmem:[%s8] sm:$0xff] %v1530
  %1537 = vst [vmem:[%s8 + $0x8] sm:$0xff] %v1531
  %1538 = vst [vmem:[%s8 + $0x10] sm:$0xff] %v1532
  %1539 = vst [vmem:[%s8 + $0x18] sm:$0xff] %v1533
  %1540 = vst [vmem:[%s8 + $0x20] sm:$0xff] %v1534
  %1541 = vst [vmem:[%s8 + $0x28] sm:$0xff] %v1535
  // Predicated region
  $region34: #{residual_block_forward.1} parent=0 // pred_check
    _
  $region35: #{residual_block_forward.1} parent=0 // pred_check_branch
    %1543 = sbr.rel (0) target = $region37
  $region36: #{residual_block_forward.1} parent=0 // pred_region
    _
  $region37: #{residual_block_forward.1} parent=0 // pred_fallthru
    _
  // Predicated region
  $region38: #{residual_block_forward.1} parent=0 // pred_check
    _
  $region39: #{residual_block_forward.1} parent=0 // pred_check_branch
    %1545 = sbr.rel (0) target = $region41
  $region40: #{residual_block_forward.1} parent=0 // pred_region
    _
  $region41: #{residual_block_forward.1} parent=0 // pred_fallthru
    _

</llo_original>
